<compile_context>
chip_gen: v5e
topology: v5e:2x2
jax: 0.10.0
libtpu: 0.0.40
codegen_flags: <defaults>
</compile_context>

<pallas_src>
import functools

import jax
import jax.numpy as jnp
from jax.experimental import pallas as pl
from jax.experimental.pallas import tpu as pltpu

_LANE = 128
_SUBLANE = 8


def _round_up(x, m):
    return ((x + m - 1) // m) * m


def _toy_model_kernel(w_ref, b_ref, x_ref, o_ref, *, n_instances, n_hidden, n_features):
    """One grid step over a [I, F, bs, 128] slab of the batch.

    w_ref : SMEM [I*H*F] f32 (resident, read as scalars)
    b_ref : SMEM [I*F]   f32 (resident, read as scalars)
    x_ref : VMEM [I, F, bs, 128]   (batch spans sublanes+lanes -> dense vregs)
    o_ref : VMEM [I, F, bs, 128]
    """
    I, H, F = n_instances, n_hidden, n_features

    for i in range(I):
        # Load the F input channels for this instance: each a dense [bs,128] tile.
        xs = [x_ref[i, f, :, :].astype(jnp.float32) for f in range(F)]

        # hidden[h] = sum_f W[i,h,f] * x[i,f]   (scalar-broadcast W, unrolled, VPU only)
        hidden = []
        for h in range(H):
            base = i * H * F + h * F
            acc = xs[0] * w_ref[base]
            for f in range(1, F):
                acc = acc + xs[f] * w_ref[base + f]
            hidden.append(acc)

        # out[f] = relu(sum_h W[i,h,f] * hidden[h] + b[i,f])
        for f in range(F):
            acc = hidden[0] * w_ref[i * H * F + f]
            for h in range(1, H):
                acc = acc + hidden[h] * w_ref[i * H * F + h * F + f]
            acc = acc + b_ref[i * F + f]
            o_ref[i, f, :, :] = jnp.maximum(acc, 0.0).astype(o_ref.dtype)


def toy_model_forward(features, W, b_final, *, batch_tile=1024):
    """
    features: [batch, n_instances, n_features]  (PyTorch axis convention)
    W:        [n_instances, n_hidden, n_features]
    b_final:  [n_instances, n_features]
    returns:  [batch, n_instances, n_features]
    """
    B, I, F = features.shape
    I2, H, F2 = W.shape
    assert (I2, F2) == (I, F)
    assert b_final.shape == (I, F)
    assert batch_tile % (_SUBLANE * _LANE) == 0

    out_dtype = features.dtype

    # --- Layout plumbing: batch goes on the minor (sublane x lane) axes. ---
    if B <= batch_tile:
        tb = _round_up(max(B, 1), _LANE)   # single grid step, full (padded) batch
        b_pad = tb
    else:
        tb = batch_tile                     # multiple of 8*128 -> (bs_tile,128) blocks
        b_pad = _round_up(B, tb)
    num_blocks = b_pad // tb
    bs_tile = tb // _LANE
    bs_total = b_pad // _LANE

    x = jnp.transpose(features, (1, 2, 0))                  # [I, F, B]
    if b_pad != B:
        x = jnp.pad(x, ((0, 0), (0, 0), (0, b_pad - B)))    # zero-pad batch
    x = x.reshape(I, F, bs_total, _LANE)                    # [I, F, bs_total, 128]

    # Tiny parameters -> SMEM scalars (f32 so accumulation is f32 even for bf16 x).
    w_flat = W.astype(jnp.float32).reshape(I * H * F)
    b_flat = b_final.astype(jnp.float32).reshape(I * F)

    kernel = functools.partial(
        _toy_model_kernel, n_instances=I, n_hidden=H, n_features=F
    )

    out4 = pl.pallas_call(
        kernel,
        out_shape=jax.ShapeDtypeStruct((I, F, bs_total, _LANE), out_dtype),
        grid=(num_blocks,),
        in_specs=[
            pl.BlockSpec(memory_space=pltpu.MemorySpace.SMEM),  # W  (whole, resident)
            pl.BlockSpec(memory_space=pltpu.MemorySpace.SMEM),  # b  (whole, resident)
            pl.BlockSpec((I, F, bs_tile, _LANE), lambda g: (0, 0, g, 0)),
        ],
        out_specs=pl.BlockSpec((I, F, bs_tile, _LANE), lambda g: (0, 0, g, 0)),
        compiler_params=pltpu.CompilerParams(dimension_semantics=("parallel",)),
    )(w_flat, b_flat, x)

    out = out4.reshape(I, F, b_pad)[:, :, :B]               # drop batch padding
    return jnp.transpose(out, (2, 0, 1))                    # [B, I, F]


def reference_forward(features, W, b_final):
    hidden = jnp.einsum("bif,ihf->bih", features, W)
    out = jnp.einsum("bih,ihf->bif", hidden, W)
    return jax.nn.relu(out + b_final[None])


if __name__ == "__main__":
    # Config: n_instances=8, n_features=5, n_hidden=2
    n_instances, n_features, n_hidden = 8, 5, 2

    key = jax.random.PRNGKey(0)
    k_w, k_x1, k_x2 = jax.random.split(key, 3)

    # Deterministic xavier-normal-style init for W (shape [I, H, F]).
    fan_in = n_hidden * n_features
    fan_out = n_instances * n_features
    std = (2.0 / (fan_in + fan_out)) ** 0.5
    W = std * jax.random.normal(k_w, (n_instances, n_hidden, n_features), dtype=jnp.float32)
    b_final = jnp.zeros((n_instances, n_features), dtype=jnp.float32)

    # Small batch (single grid step, padded to one 128-lane block).
    batch_small = 2
    x_small = jax.random.uniform(
        k_x1, (batch_small, n_instances, n_features), dtype=jnp.float32
    )
    out_small = jax.block_until_ready(toy_model_forward(x_small, W, b_final))
    ref_small = reference_forward(x_small, W, b_final)
    assert out_small.shape == (batch_small, n_instances, n_features)
    assert jnp.allclose(out_small, ref_small, atol=1e-5, rtol=1e-5), "small-batch mismatch"

    # Larger batch exercising the grid + padding path (3 parallel grid steps).
    batch_big = 2304
    x_big = jax.random.uniform(
        k_x2, (batch_big, n_instances, n_features), dtype=jnp.float32
    )
    out_big = jax.block_until_ready(toy_model_forward(x_big, W, b_final))
    ref_big = reference_forward(x_big, W, b_final)
    assert out_big.shape == (batch_big, n_instances, n_features)
    assert jnp.allclose(out_big, ref_big, atol=1e-5, rtol=1e-5), "large-batch mismatch"

    print("KERNEL_OK")
</pallas_src>

<mosaic_0001>
module attributes {stable_mosaic.version = 11 : i64} {
  func.func @_toy_model_kernel(%arg0: i32, %arg1: memref<80xf32, #tpu.memory_space<smem>>, %arg2: memref<40xf32, #tpu.memory_space<smem>>, %arg3: memref<8x5x1x128xf32, #tpu.memory_space<vmem>>, %arg4: memref<8x5x1x128xf32, #tpu.memory_space<vmem>>) attributes {dimension_semantics = [#tpu.dimension_semantics<parallel>], iteration_bounds = array<i64: 1>, scalar_prefetch = 0 : i64, scratch_operands = 0 : i64, tpu.core_type = #tpu.core_type<tc>, window_params = [{transform_indices = @transform_0, window_bounds = array<i64: 80>}, {transform_indices = @transform_1, window_bounds = array<i64: 40>}, {transform_indices = @transform_2, window_bounds = array<i64: 8, 5, 1, 128>}, {transform_indices = @transform_3, window_bounds = array<i64: 8, 5, 1, 128>}]} {
    %c0 = arith.constant 0 : index
    %c0_0 = arith.constant 0 : index
    %c0_1 = arith.constant 0 : index
    %c0_2 = arith.constant 0 : index
    %0 = vector.load %arg3[%c0, %c0_0, %c0_1, %c0_2] : memref<8x5x1x128xf32, #tpu.memory_space<vmem>>, vector<1x1x1x128xf32>
    %1 = vector.shape_cast %0 : vector<1x1x1x128xf32> to vector<1x128xf32>
    %c0_3 = arith.constant 0 : index
    %c1 = arith.constant 1 : index
    %c0_4 = arith.constant 0 : index
    %c0_5 = arith.constant 0 : index
    %2 = vector.load %arg3[%c0_3, %c1, %c0_4, %c0_5] : memref<8x5x1x128xf32, #tpu.memory_space<vmem>>, vector<1x1x1x128xf32>
    %3 = vector.shape_cast %2 : vector<1x1x1x128xf32> to vector<1x128xf32>
    %c0_6 = arith.constant 0 : index
    %c2 = arith.constant 2 : index
    %c0_7 = arith.constant 0 : index
    %c0_8 = arith.constant 0 : index
    %4 = vector.load %arg3[%c0_6, %c2, %c0_7, %c0_8] : memref<8x5x1x128xf32, #tpu.memory_space<vmem>>, vector<1x1x1x128xf32>
    %5 = vector.shape_cast %4 : vector<1x1x1x128xf32> to vector<1x128xf32>
    %c0_9 = arith.constant 0 : index
    %c3 = arith.constant 3 : index
    %c0_10 = arith.constant 0 : index
    %c0_11 = arith.constant 0 : index
    %6 = vector.load %arg3[%c0_9, %c3, %c0_10, %c0_11] : memref<8x5x1x128xf32, #tpu.memory_space<vmem>>, vector<1x1x1x128xf32>
    %7 = vector.shape_cast %6 : vector<1x1x1x128xf32> to vector<1x128xf32>
    %c0_12 = arith.constant 0 : index
    %c4 = arith.constant 4 : index
    %c0_13 = arith.constant 0 : index
    %c0_14 = arith.constant 0 : index
    %8 = vector.load %arg3[%c0_12, %c4, %c0_13, %c0_14] : memref<8x5x1x128xf32, #tpu.memory_space<vmem>>, vector<1x1x1x128xf32>
    %9 = vector.shape_cast %8 : vector<1x1x1x128xf32> to vector<1x128xf32>
    %c0_15 = arith.constant 0 : index
    %10 = memref.load %arg1[%c0_15] : memref<80xf32, #tpu.memory_space<smem>>
    %11 = vector.broadcast %10 : f32 to vector<1x128xf32>
    %12 = arith.mulf %1, %11 : vector<1x128xf32>
    %c1_16 = arith.constant 1 : index
    %13 = memref.load %arg1[%c1_16] : memref<80xf32, #tpu.memory_space<smem>>
    %14 = vector.broadcast %13 : f32 to vector<1x128xf32>
    %15 = arith.mulf %3, %14 : vector<1x128xf32>
    %16 = arith.addf %12, %15 : vector<1x128xf32>
    %c2_17 = arith.constant 2 : index
    %17 = memref.load %arg1[%c2_17] : memref<80xf32, #tpu.memory_space<smem>>
    %18 = vector.broadcast %17 : f32 to vector<1x128xf32>
    %19 = arith.mulf %5, %18 : vector<1x128xf32>
    %20 = arith.addf %16, %19 : vector<1x128xf32>
    %c3_18 = arith.constant 3 : index
    %21 = memref.load %arg1[%c3_18] : memref<80xf32, #tpu.memory_space<smem>>
    %22 = vector.broadcast %21 : f32 to vector<1x128xf32>
    %23 = arith.mulf %7, %22 : vector<1x128xf32>
    %24 = arith.addf %20, %23 : vector<1x128xf32>
    %c4_19 = arith.constant 4 : index
    %25 = memref.load %arg1[%c4_19] : memref<80xf32, #tpu.memory_space<smem>>
    %26 = vector.broadcast %25 : f32 to vector<1x128xf32>
    %27 = arith.mulf %9, %26 : vector<1x128xf32>
    %28 = arith.addf %24, %27 : vector<1x128xf32>
    %c5 = arith.constant 5 : index
    %29 = memref.load %arg1[%c5] : memref<80xf32, #tpu.memory_space<smem>>
    %30 = vector.broadcast %29 : f32 to vector<1x128xf32>
    %31 = arith.mulf %1, %30 : vector<1x128xf32>
    %c6 = arith.constant 6 : index
    %32 = memref.load %arg1[%c6] : memref<80xf32, #tpu.memory_space<smem>>
    %33 = vector.broadcast %32 : f32 to vector<1x128xf32>
    %34 = arith.mulf %3, %33 : vector<1x128xf32>
    %35 = arith.addf %31, %34 : vector<1x128xf32>
    %c7 = arith.constant 7 : index
    %36 = memref.load %arg1[%c7] : memref<80xf32, #tpu.memory_space<smem>>
    %37 = vector.broadcast %36 : f32 to vector<1x128xf32>
    %38 = arith.mulf %5, %37 : vector<1x128xf32>
    %39 = arith.addf %35, %38 : vector<1x128xf32>
    %c8 = arith.constant 8 : index
    %40 = memref.load %arg1[%c8] : memref<80xf32, #tpu.memory_space<smem>>
    %41 = vector.broadcast %40 : f32 to vector<1x128xf32>
    %42 = arith.mulf %7, %41 : vector<1x128xf32>
    %43 = arith.addf %39, %42 : vector<1x128xf32>
    %c9 = arith.constant 9 : index
    %44 = memref.load %arg1[%c9] : memref<80xf32, #tpu.memory_space<smem>>
    %45 = vector.broadcast %44 : f32 to vector<1x128xf32>
    %46 = arith.mulf %9, %45 : vector<1x128xf32>
    %47 = arith.addf %43, %46 : vector<1x128xf32>
    %c0_20 = arith.constant 0 : index
    %48 = memref.load %arg1[%c0_20] : memref<80xf32, #tpu.memory_space<smem>>
    %49 = vector.broadcast %48 : f32 to vector<1x128xf32>
    %50 = arith.mulf %28, %49 : vector<1x128xf32>
    %c5_21 = arith.constant 5 : index
    %51 = memref.load %arg1[%c5_21] : memref<80xf32, #tpu.memory_space<smem>>
    %52 = vector.broadcast %51 : f32 to vector<1x128xf32>
    %53 = arith.mulf %47, %52 : vector<1x128xf32>
    %54 = arith.addf %50, %53 : vector<1x128xf32>
    %c0_22 = arith.constant 0 : index
    %55 = memref.load %arg2[%c0_22] : memref<40xf32, #tpu.memory_space<smem>>
    %56 = vector.broadcast %55 : f32 to vector<1x128xf32>
    %57 = arith.addf %54, %56 : vector<1x128xf32>
    %cst = arith.constant 0.000000e+00 : f32
    %58 = vector.broadcast %cst : f32 to vector<1x128xf32>
    %59 = arith.maximumf %57, %58 : vector<1x128xf32>
    %c0_23 = arith.constant 0 : index
    %c0_24 = arith.constant 0 : index
    %c0_25 = arith.constant 0 : index
    %c0_26 = arith.constant 0 : index
    %60 = vector.load %arg4[%c0_23, %c0_24, %c0_25, %c0_26] : memref<8x5x1x128xf32, #tpu.memory_space<vmem>>, vector<1x1x1x128xf32>
    %61 = vector.shape_cast %60 : vector<1x1x1x128xf32> to vector<1x128xf32>
    %62 = vector.shape_cast %59 : vector<1x128xf32> to vector<1x1x1x128xf32>
    tpu.vector_store %arg4[%c0_23, %c0_24, %c0_25, %c0_26], %62 {strides = array<i32>} : memref<8x5x1x128xf32, #tpu.memory_space<vmem>>, vector<1x1x1x128xf32>,
    %c1_27 = arith.constant 1 : index
    %63 = memref.load %arg1[%c1_27] : memref<80xf32, #tpu.memory_space<smem>>
    %64 = vector.broadcast %63 : f32 to vector<1x128xf32>
    %65 = arith.mulf %28, %64 : vector<1x128xf32>
    %c6_28 = arith.constant 6 : index
    %66 = memref.load %arg1[%c6_28] : memref<80xf32, #tpu.memory_space<smem>>
    %67 = vector.broadcast %66 : f32 to vector<1x128xf32>
    %68 = arith.mulf %47, %67 : vector<1x128xf32>
    %69 = arith.addf %65, %68 : vector<1x128xf32>
    %c1_29 = arith.constant 1 : index
    %70 = memref.load %arg2[%c1_29] : memref<40xf32, #tpu.memory_space<smem>>
    %71 = vector.broadcast %70 : f32 to vector<1x128xf32>
    %72 = arith.addf %69, %71 : vector<1x128xf32>
    %cst_30 = arith.constant 0.000000e+00 : f32
    %73 = vector.broadcast %cst_30 : f32 to vector<1x128xf32>
    %74 = arith.maximumf %72, %73 : vector<1x128xf32>
    %c0_31 = arith.constant 0 : index
    %c1_32 = arith.constant 1 : index
    %c0_33 = arith.constant 0 : index
    %c0_34 = arith.constant 0 : index
    %75 = vector.load %arg4[%c0_31, %c1_32, %c0_33, %c0_34] : memref<8x5x1x128xf32, #tpu.memory_space<vmem>>, vector<1x1x1x128xf32>
    %76 = vector.shape_cast %75 : vector<1x1x1x128xf32> to vector<1x128xf32>
    %77 = vector.shape_cast %74 : vector<1x128xf32> to vector<1x1x1x128xf32>
    tpu.vector_store %arg4[%c0_31, %c1_32, %c0_33, %c0_34], %77 {strides = array<i32>} : memref<8x5x1x128xf32, #tpu.memory_space<vmem>>, vector<1x1x1x128xf32>,
    %c2_35 = arith.constant 2 : index
    %78 = memref.load %arg1[%c2_35] : memref<80xf32, #tpu.memory_space<smem>>
    %79 = vector.broadcast %78 : f32 to vector<1x128xf32>
    %80 = arith.mulf %28, %79 : vector<1x128xf32>
    %c7_36 = arith.constant 7 : index
    %81 = memref.load %arg1[%c7_36] : memref<80xf32, #tpu.memory_space<smem>>
    %82 = vector.broadcast %81 : f32 to vector<1x128xf32>
    %83 = arith.mulf %47, %82 : vector<1x128xf32>
    %84 = arith.addf %80, %83 : vector<1x128xf32>
    %c2_37 = arith.constant 2 : index
    %85 = memref.load %arg2[%c2_37] : memref<40xf32, #tpu.memory_space<smem>>
    %86 = vector.broadcast %85 : f32 to vector<1x128xf32>
    %87 = arith.addf %84, %86 : vector<1x128xf32>
    %cst_38 = arith.constant 0.000000e+00 : f32
    %88 = vector.broadcast %cst_38 : f32 to vector<1x128xf32>
    %89 = arith.maximumf %87, %88 : vector<1x128xf32>
    %c0_39 = arith.constant 0 : index
    %c2_40 = arith.constant 2 : index
    %c0_41 = arith.constant 0 : index
    %c0_42 = arith.constant 0 : index
    %90 = vector.load %arg4[%c0_39, %c2_40, %c0_41, %c0_42] : memref<8x5x1x128xf32, #tpu.memory_space<vmem>>, vector<1x1x1x128xf32>
    %91 = vector.shape_cast %90 : vector<1x1x1x128xf32> to vector<1x128xf32>
    %92 = vector.shape_cast %89 : vector<1x128xf32> to vector<1x1x1x128xf32>
    tpu.vector_store %arg4[%c0_39, %c2_40, %c0_41, %c0_42], %92 {strides = array<i32>} : memref<8x5x1x128xf32, #tpu.memory_space<vmem>>, vector<1x1x1x128xf32>,
    %c3_43 = arith.constant 3 : index
    %93 = memref.load %arg1[%c3_43] : memref<80xf32, #tpu.memory_space<smem>>
    %94 = vector.broadcast %93 : f32 to vector<1x128xf32>
    %95 = arith.mulf %28, %94 : vector<1x128xf32>
    %c8_44 = arith.constant 8 : index
    %96 = memref.load %arg1[%c8_44] : memref<80xf32, #tpu.memory_space<smem>>
    %97 = vector.broadcast %96 : f32 to vector<1x128xf32>
    %98 = arith.mulf %47, %97 : vector<1x128xf32>
    %99 = arith.addf %95, %98 : vector<1x128xf32>
    %c3_45 = arith.constant 3 : index
    %100 = memref.load %arg2[%c3_45] : memref<40xf32, #tpu.memory_space<smem>>
    %101 = vector.broadcast %100 : f32 to vector<1x128xf32>
    %102 = arith.addf %99, %101 : vector<1x128xf32>
    %cst_46 = arith.constant 0.000000e+00 : f32
    %103 = vector.broadcast %cst_46 : f32 to vector<1x128xf32>
    %104 = arith.maximumf %102, %103 : vector<1x128xf32>
    %c0_47 = arith.constant 0 : index
    %c3_48 = arith.constant 3 : index
    %c0_49 = arith.constant 0 : index
    %c0_50 = arith.constant 0 : index
    %105 = vector.load %arg4[%c0_47, %c3_48, %c0_49, %c0_50] : memref<8x5x1x128xf32, #tpu.memory_space<vmem>>, vector<1x1x1x128xf32>
    %106 = vector.shape_cast %105 : vector<1x1x1x128xf32> to vector<1x128xf32>
    %107 = vector.shape_cast %104 : vector<1x128xf32> to vector<1x1x1x128xf32>
    tpu.vector_store %arg4[%c0_47, %c3_48, %c0_49, %c0_50], %107 {strides = array<i32>} : memref<8x5x1x128xf32, #tpu.memory_space<vmem>>, vector<1x1x1x128xf32>,
    %c4_51 = arith.constant 4 : index
    %108 = memref.load %arg1[%c4_51] : memref<80xf32, #tpu.memory_space<smem>>
    %109 = vector.broadcast %108 : f32 to vector<1x128xf32>
    %110 = arith.mulf %28, %109 : vector<1x128xf32>
    %c9_52 = arith.constant 9 : index
    %111 = memref.load %arg1[%c9_52] : memref<80xf32, #tpu.memory_space<smem>>
    %112 = vector.broadcast %111 : f32 to vector<1x128xf32>
    %113 = arith.mulf %47, %112 : vector<1x128xf32>
    %114 = arith.addf %110, %113 : vector<1x128xf32>
    %c4_53 = arith.constant 4 : index
    %115 = memref.load %arg2[%c4_53] : memref<40xf32, #tpu.memory_space<smem>>
    %116 = vector.broadcast %115 : f32 to vector<1x128xf32>
    %117 = arith.addf %114, %116 : vector<1x128xf32>
    %cst_54 = arith.constant 0.000000e+00 : f32
    %118 = vector.broadcast %cst_54 : f32 to vector<1x128xf32>
    %119 = arith.maximumf %117, %118 : vector<1x128xf32>
    %c0_55 = arith.constant 0 : index
    %c4_56 = arith.constant 4 : index
    %c0_57 = arith.constant 0 : index
    %c0_58 = arith.constant 0 : index
    %120 = vector.load %arg4[%c0_55, %c4_56, %c0_57, %c0_58] : memref<8x5x1x128xf32, #tpu.memory_space<vmem>>, vector<1x1x1x128xf32>
    %121 = vector.shape_cast %120 : vector<1x1x1x128xf32> to vector<1x128xf32>
    %122 = vector.shape_cast %119 : vector<1x128xf32> to vector<1x1x1x128xf32>
    tpu.vector_store %arg4[%c0_55, %c4_56, %c0_57, %c0_58], %122 {strides = array<i32>} : memref<8x5x1x128xf32, #tpu.memory_space<vmem>>, vector<1x1x1x128xf32>,
    %c1_59 = arith.constant 1 : index
    %c0_60 = arith.constant 0 : index
    %c0_61 = arith.constant 0 : index
    %c0_62 = arith.constant 0 : index
    %123 = vector.load %arg3[%c1_59, %c0_60, %c0_61, %c0_62] : memref<8x5x1x128xf32, #tpu.memory_space<vmem>>, vector<1x1x1x128xf32>
    %124 = vector.shape_cast %123 : vector<1x1x1x128xf32> to vector<1x128xf32>
    %c1_63 = arith.constant 1 : index
    %c1_64 = arith.constant 1 : index
    %c0_65 = arith.constant 0 : index
    %c0_66 = arith.constant 0 : index
    %125 = vector.load %arg3[%c1_63, %c1_64, %c0_65, %c0_66] : memref<8x5x1x128xf32, #tpu.memory_space<vmem>>, vector<1x1x1x128xf32>
    %126 = vector.shape_cast %125 : vector<1x1x1x128xf32> to vector<1x128xf32>
    %c1_67 = arith.constant 1 : index
    %c2_68 = arith.constant 2 : index
    %c0_69 = arith.constant 0 : index
    %c0_70 = arith.constant 0 : index
    %127 = vector.load %arg3[%c1_67, %c2_68, %c0_69, %c0_70] : memref<8x5x1x128xf32, #tpu.memory_space<vmem>>, vector<1x1x1x128xf32>
    %128 = vector.shape_cast %127 : vector<1x1x1x128xf32> to vector<1x128xf32>
    %c1_71 = arith.constant 1 : index
    %c3_72 = arith.constant 3 : index
    %c0_73 = arith.constant 0 : index
    %c0_74 = arith.constant 0 : index
    %129 = vector.load %arg3[%c1_71, %c3_72, %c0_73, %c0_74] : memref<8x5x1x128xf32, #tpu.memory_space<vmem>>, vector<1x1x1x128xf32>
    %130 = vector.shape_cast %129 : vector<1x1x1x128xf32> to vector<1x128xf32>
    %c1_75 = arith.constant 1 : index
    %c4_76 = arith.constant 4 : index
    %c0_77 = arith.constant 0 : index
    %c0_78 = arith.constant 0 : index
    %131 = vector.load %arg3[%c1_75, %c4_76, %c0_77, %c0_78] : memref<8x5x1x128xf32, #tpu.memory_space<vmem>>, vector<1x1x1x128xf32>
    %132 = vector.shape_cast %131 : vector<1x1x1x128xf32> to vector<1x128xf32>
    %c10 = arith.constant 10 : index
    %133 = memref.load %arg1[%c10] : memref<80xf32, #tpu.memory_space<smem>>
    %134 = vector.broadcast %133 : f32 to vector<1x128xf32>
    %135 = arith.mulf %124, %134 : vector<1x128xf32>
    %c11 = arith.constant 11 : index
    %136 = memref.load %arg1[%c11] : memref<80xf32, #tpu.memory_space<smem>>
    %137 = vector.broadcast %136 : f32 to vector<1x128xf32>
    %138 = arith.mulf %126, %137 : vector<1x128xf32>
    %139 = arith.addf %135, %138 : vector<1x128xf32>
    %c12 = arith.constant 12 : index
    %140 = memref.load %arg1[%c12] : memref<80xf32, #tpu.memory_space<smem>>
    %141 = vector.broadcast %140 : f32 to vector<1x128xf32>
    %142 = arith.mulf %128, %141 : vector<1x128xf32>
    %143 = arith.addf %139, %142 : vector<1x128xf32>
    %c13 = arith.constant 13 : index
    %144 = memref.load %arg1[%c13] : memref<80xf32, #tpu.memory_space<smem>>
    %145 = vector.broadcast %144 : f32 to vector<1x128xf32>
    %146 = arith.mulf %130, %145 : vector<1x128xf32>
    %147 = arith.addf %143, %146 : vector<1x128xf32>
    %c14 = arith.constant 14 : index
    %148 = memref.load %arg1[%c14] : memref<80xf32, #tpu.memory_space<smem>>
    %149 = vector.broadcast %148 : f32 to vector<1x128xf32>
    %150 = arith.mulf %132, %149 : vector<1x128xf32>
    %151 = arith.addf %147, %150 : vector<1x128xf32>
    %c15 = arith.constant 15 : index
    %152 = memref.load %arg1[%c15] : memref<80xf32, #tpu.memory_space<smem>>
    %153 = vector.broadcast %152 : f32 to vector<1x128xf32>
    %154 = arith.mulf %124, %153 : vector<1x128xf32>
    %c16 = arith.constant 16 : index
    %155 = memref.load %arg1[%c16] : memref<80xf32, #tpu.memory_space<smem>>
    %156 = vector.broadcast %155 : f32 to vector<1x128xf32>
    %157 = arith.mulf %126, %156 : vector<1x128xf32>
    %158 = arith.addf %154, %157 : vector<1x128xf32>
    %c17 = arith.constant 17 : index
    %159 = memref.load %arg1[%c17] : memref<80xf32, #tpu.memory_space<smem>>
    %160 = vector.broadcast %159 : f32 to vector<1x128xf32>
    %161 = arith.mulf %128, %160 : vector<1x128xf32>
    %162 = arith.addf %158, %161 : vector<1x128xf32>
    %c18 = arith.constant 18 : index
    %163 = memref.load %arg1[%c18] : memref<80xf32, #tpu.memory_space<smem>>
    %164 = vector.broadcast %163 : f32 to vector<1x128xf32>
    %165 = arith.mulf %130, %164 : vector<1x128xf32>
    %166 = arith.addf %162, %165 : vector<1x128xf32>
    %c19 = arith.constant 19 : index
    %167 = memref.load %arg1[%c19] : memref<80xf32, #tpu.memory_space<smem>>
    %168 = vector.broadcast %167 : f32 to vector<1x128xf32>
    %169 = arith.mulf %132, %168 : vector<1x128xf32>
    %170 = arith.addf %166, %169 : vector<1x128xf32>
    %c10_79 = arith.constant 10 : index
    %171 = memref.load %arg1[%c10_79] : memref<80xf32, #tpu.memory_space<smem>>
    %172 = vector.broadcast %171 : f32 to vector<1x128xf32>
    %173 = arith.mulf %151, %172 : vector<1x128xf32>
    %c15_80 = arith.constant 15 : index
    %174 = memref.load %arg1[%c15_80] : memref<80xf32, #tpu.memory_space<smem>>
    %175 = vector.broadcast %174 : f32 to vector<1x128xf32>
    %176 = arith.mulf %170, %175 : vector<1x128xf32>
    %177 = arith.addf %173, %176 : vector<1x128xf32>
    %c5_81 = arith.constant 5 : index
    %178 = memref.load %arg2[%c5_81] : memref<40xf32, #tpu.memory_space<smem>>
    %179 = vector.broadcast %178 : f32 to vector<1x128xf32>
    %180 = arith.addf %177, %179 : vector<1x128xf32>
    %cst_82 = arith.constant 0.000000e+00 : f32
    %181 = vector.broadcast %cst_82 : f32 to vector<1x128xf32>
    %182 = arith.maximumf %180, %181 : vector<1x128xf32>
    %c1_83 = arith.constant 1 : index
    %c0_84 = arith.constant 0 : index
    %c0_85 = arith.constant 0 : index
    %c0_86 = arith.constant 0 : index
    %183 = vector.load %arg4[%c1_83, %c0_84, %c0_85, %c0_86] : memref<8x5x1x128xf32, #tpu.memory_space<vmem>>, vector<1x1x1x128xf32>
    %184 = vector.shape_cast %183 : vector<1x1x1x128xf32> to vector<1x128xf32>
    %185 = vector.shape_cast %182 : vector<1x128xf32> to vector<1x1x1x128xf32>
    tpu.vector_store %arg4[%c1_83, %c0_84, %c0_85, %c0_86], %185 {strides = array<i32>} : memref<8x5x1x128xf32, #tpu.memory_space<vmem>>, vector<1x1x1x128xf32>,
    %c11_87 = arith.constant 11 : index
    %186 = memref.load %arg1[%c11_87] : memref<80xf32, #tpu.memory_space<smem>>
    %187 = vector.broadcast %186 : f32 to vector<1x128xf32>
    %188 = arith.mulf %151, %187 : vector<1x128xf32>
    %c16_88 = arith.constant 16 : index
    %189 = memref.load %arg1[%c16_88] : memref<80xf32, #tpu.memory_space<smem>>
    %190 = vector.broadcast %189 : f32 to vector<1x128xf32>
    %191 = arith.mulf %170, %190 : vector<1x128xf32>
    %192 = arith.addf %188, %191 : vector<1x128xf32>
    %c6_89 = arith.constant 6 : index
    %193 = memref.load %arg2[%c6_89] : memref<40xf32, #tpu.memory_space<smem>>
    %194 = vector.broadcast %193 : f32 to vector<1x128xf32>
    %195 = arith.addf %192, %194 : vector<1x128xf32>
    %cst_90 = arith.constant 0.000000e+00 : f32
    %196 = vector.broadcast %cst_90 : f32 to vector<1x128xf32>
    %197 = arith.maximumf %195, %196 : vector<1x128xf32>
    %c1_91 = arith.constant 1 : index
    %c1_92 = arith.constant 1 : index
    %c0_93 = arith.constant 0 : index
    %c0_94 = arith.constant 0 : index
    %198 = vector.load %arg4[%c1_91, %c1_92, %c0_93, %c0_94] : memref<8x5x1x128xf32, #tpu.memory_space<vmem>>, vector<1x1x1x128xf32>
    %199 = vector.shape_cast %198 : vector<1x1x1x128xf32> to vector<1x128xf32>
    %200 = vector.shape_cast %197 : vector<1x128xf32> to vector<1x1x1x128xf32>
    tpu.vector_store %arg4[%c1_91, %c1_92, %c0_93, %c0_94], %200 {strides = array<i32>} : memref<8x5x1x128xf32, #tpu.memory_space<vmem>>, vector<1x1x1x128xf32>,
    %c12_95 = arith.constant 12 : index
    %201 = memref.load %arg1[%c12_95] : memref<80xf32, #tpu.memory_space<smem>>
    %202 = vector.broadcast %201 : f32 to vector<1x128xf32>
    %203 = arith.mulf %151, %202 : vector<1x128xf32>
    %c17_96 = arith.constant 17 : index
    %204 = memref.load %arg1[%c17_96] : memref<80xf32, #tpu.memory_space<smem>>
    %205 = vector.broadcast %204 : f32 to vector<1x128xf32>
    %206 = arith.mulf %170, %205 : vector<1x128xf32>
    %207 = arith.addf %203, %206 : vector<1x128xf32>
    %c7_97 = arith.constant 7 : index
    %208 = memref.load %arg2[%c7_97] : memref<40xf32, #tpu.memory_space<smem>>
    %209 = vector.broadcast %208 : f32 to vector<1x128xf32>
    %210 = arith.addf %207, %209 : vector<1x128xf32>
    %cst_98 = arith.constant 0.000000e+00 : f32
    %211 = vector.broadcast %cst_98 : f32 to vector<1x128xf32>
    %212 = arith.maximumf %210, %211 : vector<1x128xf32>
    %c1_99 = arith.constant 1 : index
    %c2_100 = arith.constant 2 : index
    %c0_101 = arith.constant 0 : index
    %c0_102 = arith.constant 0 : index
    %213 = vector.load %arg4[%c1_99, %c2_100, %c0_101, %c0_102] : memref<8x5x1x128xf32, #tpu.memory_space<vmem>>, vector<1x1x1x128xf32>
    %214 = vector.shape_cast %213 : vector<1x1x1x128xf32> to vector<1x128xf32>
    %215 = vector.shape_cast %212 : vector<1x128xf32> to vector<1x1x1x128xf32>
    tpu.vector_store %arg4[%c1_99, %c2_100, %c0_101, %c0_102], %215 {strides = array<i32>} : memref<8x5x1x128xf32, #tpu.memory_space<vmem>>, vector<1x1x1x128xf32>,
    %c13_103 = arith.constant 13 : index
    %216 = memref.load %arg1[%c13_103] : memref<80xf32, #tpu.memory_space<smem>>
    %217 = vector.broadcast %216 : f32 to vector<1x128xf32>
    %218 = arith.mulf %151, %217 : vector<1x128xf32>
    %c18_104 = arith.constant 18 : index
    %219 = memref.load %arg1[%c18_104] : memref<80xf32, #tpu.memory_space<smem>>
    %220 = vector.broadcast %219 : f32 to vector<1x128xf32>
    %221 = arith.mulf %170, %220 : vector<1x128xf32>
    %222 = arith.addf %218, %221 : vector<1x128xf32>
    %c8_105 = arith.constant 8 : index
    %223 = memref.load %arg2[%c8_105] : memref<40xf32, #tpu.memory_space<smem>>
    %224 = vector.broadcast %223 : f32 to vector<1x128xf32>
    %225 = arith.addf %222, %224 : vector<1x128xf32>
    %cst_106 = arith.constant 0.000000e+00 : f32
    %226 = vector.broadcast %cst_106 : f32 to vector<1x128xf32>
    %227 = arith.maximumf %225, %226 : vector<1x128xf32>
    %c1_107 = arith.constant 1 : index
    %c3_108 = arith.constant 3 : index
    %c0_109 = arith.constant 0 : index
    %c0_110 = arith.constant 0 : index
    %228 = vector.load %arg4[%c1_107, %c3_108, %c0_109, %c0_110] : memref<8x5x1x128xf32, #tpu.memory_space<vmem>>, vector<1x1x1x128xf32>
    %229 = vector.shape_cast %228 : vector<1x1x1x128xf32> to vector<1x128xf32>
    %230 = vector.shape_cast %227 : vector<1x128xf32> to vector<1x1x1x128xf32>
    tpu.vector_store %arg4[%c1_107, %c3_108, %c0_109, %c0_110], %230 {strides = array<i32>} : memref<8x5x1x128xf32, #tpu.memory_space<vmem>>, vector<1x1x1x128xf32>,
    %c14_111 = arith.constant 14 : index
    %231 = memref.load %arg1[%c14_111] : memref<80xf32, #tpu.memory_space<smem>>
    %232 = vector.broadcast %231 : f32 to vector<1x128xf32>
    %233 = arith.mulf %151, %232 : vector<1x128xf32>
    %c19_112 = arith.constant 19 : index
    %234 = memref.load %arg1[%c19_112] : memref<80xf32, #tpu.memory_space<smem>>
    %235 = vector.broadcast %234 : f32 to vector<1x128xf32>
    %236 = arith.mulf %170, %235 : vector<1x128xf32>
    %237 = arith.addf %233, %236 : vector<1x128xf32>
    %c9_113 = arith.constant 9 : index
    %238 = memref.load %arg2[%c9_113] : memref<40xf32, #tpu.memory_space<smem>>
    %239 = vector.broadcast %238 : f32 to vector<1x128xf32>
    %240 = arith.addf %237, %239 : vector<1x128xf32>
    %cst_114 = arith.constant 0.000000e+00 : f32
    %241 = vector.broadcast %cst_114 : f32 to vector<1x128xf32>
    %242 = arith.maximumf %240, %241 : vector<1x128xf32>
    %c1_115 = arith.constant 1 : index
    %c4_116 = arith.constant 4 : index
    %c0_117 = arith.constant 0 : index
    %c0_118 = arith.constant 0 : index
    %243 = vector.load %arg4[%c1_115, %c4_116, %c0_117, %c0_118] : memref<8x5x1x128xf32, #tpu.memory_space<vmem>>, vector<1x1x1x128xf32>
    %244 = vector.shape_cast %243 : vector<1x1x1x128xf32> to vector<1x128xf32>
    %245 = vector.shape_cast %242 : vector<1x128xf32> to vector<1x1x1x128xf32>
    tpu.vector_store %arg4[%c1_115, %c4_116, %c0_117, %c0_118], %245 {strides = array<i32>} : memref<8x5x1x128xf32, #tpu.memory_space<vmem>>, vector<1x1x1x128xf32>,
    %c2_119 = arith.constant 2 : index
    %c0_120 = arith.constant 0 : index
    %c0_121 = arith.constant 0 : index
    %c0_122 = arith.constant 0 : index
    %246 = vector.load %arg3[%c2_119, %c0_120, %c0_121, %c0_122] : memref<8x5x1x128xf32, #tpu.memory_space<vmem>>, vector<1x1x1x128xf32>
    %247 = vector.shape_cast %246 : vector<1x1x1x128xf32> to vector<1x128xf32>
    %c2_123 = arith.constant 2 : index
    %c1_124 = arith.constant 1 : index
    %c0_125 = arith.constant 0 : index
    %c0_126 = arith.constant 0 : index
    %248 = vector.load %arg3[%c2_123, %c1_124, %c0_125, %c0_126] : memref<8x5x1x128xf32, #tpu.memory_space<vmem>>, vector<1x1x1x128xf32>
    %249 = vector.shape_cast %248 : vector<1x1x1x128xf32> to vector<1x128xf32>
    %c2_127 = arith.constant 2 : index
    %c2_128 = arith.constant 2 : index
    %c0_129 = arith.constant 0 : index
    %c0_130 = arith.constant 0 : index
    %250 = vector.load %arg3[%c2_127, %c2_128, %c0_129, %c0_130] : memref<8x5x1x128xf32, #tpu.memory_space<vmem>>, vector<1x1x1x128xf32>
    %251 = vector.shape_cast %250 : vector<1x1x1x128xf32> to vector<1x128xf32>
    %c2_131 = arith.constant 2 : index
    %c3_132 = arith.constant 3 : index
    %c0_133 = arith.constant 0 : index
    %c0_134 = arith.constant 0 : index
    %252 = vector.load %arg3[%c2_131, %c3_132, %c0_133, %c0_134] : memref<8x5x1x128xf32, #tpu.memory_space<vmem>>, vector<1x1x1x128xf32>
    %253 = vector.shape_cast %252 : vector<1x1x1x128xf32> to vector<1x128xf32>
    %c2_135 = arith.constant 2 : index
    %c4_136 = arith.constant 4 : index
    %c0_137 = arith.constant 0 : index
    %c0_138 = arith.constant 0 : index
    %254 = vector.load %arg3[%c2_135, %c4_136, %c0_137, %c0_138] : memref<8x5x1x128xf32, #tpu.memory_space<vmem>>, vector<1x1x1x128xf32>
    %255 = vector.shape_cast %254 : vector<1x1x1x128xf32> to vector<1x128xf32>
    %c20 = arith.constant 20 : index
    %256 = memref.load %arg1[%c20] : memref<80xf32, #tpu.memory_space<smem>>
    %257 = vector.broadcast %256 : f32 to vector<1x128xf32>
    %258 = arith.mulf %247, %257 : vector<1x128xf32>
    %c21 = arith.constant 21 : index
    %259 = memref.load %arg1[%c21] : memref<80xf32, #tpu.memory_space<smem>>
    %260 = vector.broadcast %259 : f32 to vector<1x128xf32>
    %261 = arith.mulf %249, %260 : vector<1x128xf32>
    %262 = arith.addf %258, %261 : vector<1x128xf32>
    %c22 = arith.constant 22 : index
    %263 = memref.load %arg1[%c22] : memref<80xf32, #tpu.memory_space<smem>>
    %264 = vector.broadcast %263 : f32 to vector<1x128xf32>
    %265 = arith.mulf %251, %264 : vector<1x128xf32>
    %266 = arith.addf %262, %265 : vector<1x128xf32>
    %c23 = arith.constant 23 : index
    %267 = memref.load %arg1[%c23] : memref<80xf32, #tpu.memory_space<smem>>
    %268 = vector.broadcast %267 : f32 to vector<1x128xf32>
    %269 = arith.mulf %253, %268 : vector<1x128xf32>
    %270 = arith.addf %266, %269 : vector<1x128xf32>
    %c24 = arith.constant 24 : index
    %271 = memref.load %arg1[%c24] : memref<80xf32, #tpu.memory_space<smem>>
    %272 = vector.broadcast %271 : f32 to vector<1x128xf32>
    %273 = arith.mulf %255, %272 : vector<1x128xf32>
    %274 = arith.addf %270, %273 : vector<1x128xf32>
    %c25 = arith.constant 25 : index
    %275 = memref.load %arg1[%c25] : memref<80xf32, #tpu.memory_space<smem>>
    %276 = vector.broadcast %275 : f32 to vector<1x128xf32>
    %277 = arith.mulf %247, %276 : vector<1x128xf32>
    %c26 = arith.constant 26 : index
    %278 = memref.load %arg1[%c26] : memref<80xf32, #tpu.memory_space<smem>>
    %279 = vector.broadcast %278 : f32 to vector<1x128xf32>
    %280 = arith.mulf %249, %279 : vector<1x128xf32>
    %281 = arith.addf %277, %280 : vector<1x128xf32>
    %c27 = arith.constant 27 : index
    %282 = memref.load %arg1[%c27] : memref<80xf32, #tpu.memory_space<smem>>
    %283 = vector.broadcast %282 : f32 to vector<1x128xf32>
    %284 = arith.mulf %251, %283 : vector<1x128xf32>
    %285 = arith.addf %281, %284 : vector<1x128xf32>
    %c28 = arith.constant 28 : index
    %286 = memref.load %arg1[%c28] : memref<80xf32, #tpu.memory_space<smem>>
    %287 = vector.broadcast %286 : f32 to vector<1x128xf32>
    %288 = arith.mulf %253, %287 : vector<1x128xf32>
    %289 = arith.addf %285, %288 : vector<1x128xf32>
    %c29 = arith.constant 29 : index
    %290 = memref.load %arg1[%c29] : memref<80xf32, #tpu.memory_space<smem>>
    %291 = vector.broadcast %290 : f32 to vector<1x128xf32>
    %292 = arith.mulf %255, %291 : vector<1x128xf32>
    %293 = arith.addf %289, %292 : vector<1x128xf32>
    %c20_139 = arith.constant 20 : index
    %294 = memref.load %arg1[%c20_139] : memref<80xf32, #tpu.memory_space<smem>>
    %295 = vector.broadcast %294 : f32 to vector<1x128xf32>
    %296 = arith.mulf %274, %295 : vector<1x128xf32>
    %c25_140 = arith.constant 25 : index
    %297 = memref.load %arg1[%c25_140] : memref<80xf32, #tpu.memory_space<smem>>
    %298 = vector.broadcast %297 : f32 to vector<1x128xf32>
    %299 = arith.mulf %293, %298 : vector<1x128xf32>
    %300 = arith.addf %296, %299 : vector<1x128xf32>
    %c10_141 = arith.constant 10 : index
    %301 = memref.load %arg2[%c10_141] : memref<40xf32, #tpu.memory_space<smem>>
    %302 = vector.broadcast %301 : f32 to vector<1x128xf32>
    %303 = arith.addf %300, %302 : vector<1x128xf32>
    %cst_142 = arith.constant 0.000000e+00 : f32
    %304 = vector.broadcast %cst_142 : f32 to vector<1x128xf32>
    %305 = arith.maximumf %303, %304 : vector<1x128xf32>
    %c2_143 = arith.constant 2 : index
    %c0_144 = arith.constant 0 : index
    %c0_145 = arith.constant 0 : index
    %c0_146 = arith.constant 0 : index
    %306 = vector.load %arg4[%c2_143, %c0_144, %c0_145, %c0_146] : memref<8x5x1x128xf32, #tpu.memory_space<vmem>>, vector<1x1x1x128xf32>
    %307 = vector.shape_cast %306 : vector<1x1x1x128xf32> to vector<1x128xf32>
    %308 = vector.shape_cast %305 : vector<1x128xf32> to vector<1x1x1x128xf32>
    tpu.vector_store %arg4[%c2_143, %c0_144, %c0_145, %c0_146], %308 {strides = array<i32>} : memref<8x5x1x128xf32, #tpu.memory_space<vmem>>, vector<1x1x1x128xf32>,
    %c21_147 = arith.constant 21 : index
    %309 = memref.load %arg1[%c21_147] : memref<80xf32, #tpu.memory_space<smem>>
    %310 = vector.broadcast %309 : f32 to vector<1x128xf32>
    %311 = arith.mulf %274, %310 : vector<1x128xf32>
    %c26_148 = arith.constant 26 : index
    %312 = memref.load %arg1[%c26_148] : memref<80xf32, #tpu.memory_space<smem>>
    %313 = vector.broadcast %312 : f32 to vector<1x128xf32>
    %314 = arith.mulf %293, %313 : vector<1x128xf32>
    %315 = arith.addf %311, %314 : vector<1x128xf32>
    %c11_149 = arith.constant 11 : index
    %316 = memref.load %arg2[%c11_149] : memref<40xf32, #tpu.memory_space<smem>>
    %317 = vector.broadcast %316 : f32 to vector<1x128xf32>
    %318 = arith.addf %315, %317 : vector<1x128xf32>
    %cst_150 = arith.constant 0.000000e+00 : f32
    %319 = vector.broadcast %cst_150 : f32 to vector<1x128xf32>
    %320 = arith.maximumf %318, %319 : vector<1x128xf32>
    %c2_151 = arith.constant 2 : index
    %c1_152 = arith.constant 1 : index
    %c0_153 = arith.constant 0 : index
    %c0_154 = arith.constant 0 : index
    %321 = vector.load %arg4[%c2_151, %c1_152, %c0_153, %c0_154] : memref<8x5x1x128xf32, #tpu.memory_space<vmem>>, vector<1x1x1x128xf32>
    %322 = vector.shape_cast %321 : vector<1x1x1x128xf32> to vector<1x128xf32>
    %323 = vector.shape_cast %320 : vector<1x128xf32> to vector<1x1x1x128xf32>
    tpu.vector_store %arg4[%c2_151, %c1_152, %c0_153, %c0_154], %323 {strides = array<i32>} : memref<8x5x1x128xf32, #tpu.memory_space<vmem>>, vector<1x1x1x128xf32>,
    %c22_155 = arith.constant 22 : index
    %324 = memref.load %arg1[%c22_155] : memref<80xf32, #tpu.memory_space<smem>>
    %325 = vector.broadcast %324 : f32 to vector<1x128xf32>
    %326 = arith.mulf %274, %325 : vector<1x128xf32>
    %c27_156 = arith.constant 27 : index
    %327 = memref.load %arg1[%c27_156] : memref<80xf32, #tpu.memory_space<smem>>
    %328 = vector.broadcast %327 : f32 to vector<1x128xf32>
    %329 = arith.mulf %293, %328 : vector<1x128xf32>
    %330 = arith.addf %326, %329 : vector<1x128xf32>
    %c12_157 = arith.constant 12 : index
    %331 = memref.load %arg2[%c12_157] : memref<40xf32, #tpu.memory_space<smem>>
    %332 = vector.broadcast %331 : f32 to vector<1x128xf32>
    %333 = arith.addf %330, %332 : vector<1x128xf32>
    %cst_158 = arith.constant 0.000000e+00 : f32
    %334 = vector.broadcast %cst_158 : f32 to vector<1x128xf32>
    %335 = arith.maximumf %333, %334 : vector<1x128xf32>
    %c2_159 = arith.constant 2 : index
    %c2_160 = arith.constant 2 : index
    %c0_161 = arith.constant 0 : index
    %c0_162 = arith.constant 0 : index
    %336 = vector.load %arg4[%c2_159, %c2_160, %c0_161, %c0_162] : memref<8x5x1x128xf32, #tpu.memory_space<vmem>>, vector<1x1x1x128xf32>
    %337 = vector.shape_cast %336 : vector<1x1x1x128xf32> to vector<1x128xf32>
    %338 = vector.shape_cast %335 : vector<1x128xf32> to vector<1x1x1x128xf32>
    tpu.vector_store %arg4[%c2_159, %c2_160, %c0_161, %c0_162], %338 {strides = array<i32>} : memref<8x5x1x128xf32, #tpu.memory_space<vmem>>, vector<1x1x1x128xf32>,
    %c23_163 = arith.constant 23 : index
    %339 = memref.load %arg1[%c23_163] : memref<80xf32, #tpu.memory_space<smem>>
    %340 = vector.broadcast %339 : f32 to vector<1x128xf32>
    %341 = arith.mulf %274, %340 : vector<1x128xf32>
    %c28_164 = arith.constant 28 : index
    %342 = memref.load %arg1[%c28_164] : memref<80xf32, #tpu.memory_space<smem>>
    %343 = vector.broadcast %342 : f32 to vector<1x128xf32>
    %344 = arith.mulf %293, %343 : vector<1x128xf32>
    %345 = arith.addf %341, %344 : vector<1x128xf32>
    %c13_165 = arith.constant 13 : index
    %346 = memref.load %arg2[%c13_165] : memref<40xf32, #tpu.memory_space<smem>>
    %347 = vector.broadcast %346 : f32 to vector<1x128xf32>
    %348 = arith.addf %345, %347 : vector<1x128xf32>
    %cst_166 = arith.constant 0.000000e+00 : f32
    %349 = vector.broadcast %cst_166 : f32 to vector<1x128xf32>
    %350 = arith.maximumf %348, %349 : vector<1x128xf32>
    %c2_167 = arith.constant 2 : index
    %c3_168 = arith.constant 3 : index
    %c0_169 = arith.constant 0 : index
    %c0_170 = arith.constant 0 : index
    %351 = vector.load %arg4[%c2_167, %c3_168, %c0_169, %c0_170] : memref<8x5x1x128xf32, #tpu.memory_space<vmem>>, vector<1x1x1x128xf32>
    %352 = vector.shape_cast %351 : vector<1x1x1x128xf32> to vector<1x128xf32>
    %353 = vector.shape_cast %350 : vector<1x128xf32> to vector<1x1x1x128xf32>
    tpu.vector_store %arg4[%c2_167, %c3_168, %c0_169, %c0_170], %353 {strides = array<i32>} : memref<8x5x1x128xf32, #tpu.memory_space<vmem>>, vector<1x1x1x128xf32>,
    %c24_171 = arith.constant 24 : index
    %354 = memref.load %arg1[%c24_171] : memref<80xf32, #tpu.memory_space<smem>>
    %355 = vector.broadcast %354 : f32 to vector<1x128xf32>
    %356 = arith.mulf %274, %355 : vector<1x128xf32>
    %c29_172 = arith.constant 29 : index
    %357 = memref.load %arg1[%c29_172] : memref<80xf32, #tpu.memory_space<smem>>
    %358 = vector.broadcast %357 : f32 to vector<1x128xf32>
    %359 = arith.mulf %293, %358 : vector<1x128xf32>
    %360 = arith.addf %356, %359 : vector<1x128xf32>
    %c14_173 = arith.constant 14 : index
    %361 = memref.load %arg2[%c14_173] : memref<40xf32, #tpu.memory_space<smem>>
    %362 = vector.broadcast %361 : f32 to vector<1x128xf32>
    %363 = arith.addf %360, %362 : vector<1x128xf32>
    %cst_174 = arith.constant 0.000000e+00 : f32
    %364 = vector.broadcast %cst_174 : f32 to vector<1x128xf32>
    %365 = arith.maximumf %363, %364 : vector<1x128xf32>
    %c2_175 = arith.constant 2 : index
    %c4_176 = arith.constant 4 : index
    %c0_177 = arith.constant 0 : index
    %c0_178 = arith.constant 0 : index
    %366 = vector.load %arg4[%c2_175, %c4_176, %c0_177, %c0_178] : memref<8x5x1x128xf32, #tpu.memory_space<vmem>>, vector<1x1x1x128xf32>
    %367 = vector.shape_cast %366 : vector<1x1x1x128xf32> to vector<1x128xf32>
    %368 = vector.shape_cast %365 : vector<1x128xf32> to vector<1x1x1x128xf32>
    tpu.vector_store %arg4[%c2_175, %c4_176, %c0_177, %c0_178], %368 {strides = array<i32>} : memref<8x5x1x128xf32, #tpu.memory_space<vmem>>, vector<1x1x1x128xf32>,
    %c3_179 = arith.constant 3 : index
    %c0_180 = arith.constant 0 : index
    %c0_181 = arith.constant 0 : index
    %c0_182 = arith.constant 0 : index
    %369 = vector.load %arg3[%c3_179, %c0_180, %c0_181, %c0_182] : memref<8x5x1x128xf32, #tpu.memory_space<vmem>>, vector<1x1x1x128xf32>
    %370 = vector.shape_cast %369 : vector<1x1x1x128xf32> to vector<1x128xf32>
    %c3_183 = arith.constant 3 : index
    %c1_184 = arith.constant 1 : index
    %c0_185 = arith.constant 0 : index
    %c0_186 = arith.constant 0 : index
    %371 = vector.load %arg3[%c3_183, %c1_184, %c0_185, %c0_186] : memref<8x5x1x128xf32, #tpu.memory_space<vmem>>, vector<1x1x1x128xf32>
    %372 = vector.shape_cast %371 : vector<1x1x1x128xf32> to vector<1x128xf32>
    %c3_187 = arith.constant 3 : index
    %c2_188 = arith.constant 2 : index
    %c0_189 = arith.constant 0 : index
    %c0_190 = arith.constant 0 : index
    %373 = vector.load %arg3[%c3_187, %c2_188, %c0_189, %c0_190] : memref<8x5x1x128xf32, #tpu.memory_space<vmem>>, vector<1x1x1x128xf32>
    %374 = vector.shape_cast %373 : vector<1x1x1x128xf32> to vector<1x128xf32>
    %c3_191 = arith.constant 3 : index
    %c3_192 = arith.constant 3 : index
    %c0_193 = arith.constant 0 : index
    %c0_194 = arith.constant 0 : index
    %375 = vector.load %arg3[%c3_191, %c3_192, %c0_193, %c0_194] : memref<8x5x1x128xf32, #tpu.memory_space<vmem>>, vector<1x1x1x128xf32>
    %376 = vector.shape_cast %375 : vector<1x1x1x128xf32> to vector<1x128xf32>
    %c3_195 = arith.constant 3 : index
    %c4_196 = arith.constant 4 : index
    %c0_197 = arith.constant 0 : index
    %c0_198 = arith.constant 0 : index
    %377 = vector.load %arg3[%c3_195, %c4_196, %c0_197, %c0_198] : memref<8x5x1x128xf32, #tpu.memory_space<vmem>>, vector<1x1x1x128xf32>
    %378 = vector.shape_cast %377 : vector<1x1x1x128xf32> to vector<1x128xf32>
    %c30 = arith.constant 30 : index
    %379 = memref.load %arg1[%c30] : memref<80xf32, #tpu.memory_space<smem>>
    %380 = vector.broadcast %379 : f32 to vector<1x128xf32>
    %381 = arith.mulf %370, %380 : vector<1x128xf32>
    %c31 = arith.constant 31 : index
    %382 = memref.load %arg1[%c31] : memref<80xf32, #tpu.memory_space<smem>>
    %383 = vector.broadcast %382 : f32 to vector<1x128xf32>
    %384 = arith.mulf %372, %383 : vector<1x128xf32>
    %385 = arith.addf %381, %384 : vector<1x128xf32>
    %c32 = arith.constant 32 : index
    %386 = memref.load %arg1[%c32] : memref<80xf32, #tpu.memory_space<smem>>
    %387 = vector.broadcast %386 : f32 to vector<1x128xf32>
    %388 = arith.mulf %374, %387 : vector<1x128xf32>
    %389 = arith.addf %385, %388 : vector<1x128xf32>
    %c33 = arith.constant 33 : index
    %390 = memref.load %arg1[%c33] : memref<80xf32, #tpu.memory_space<smem>>
    %391 = vector.broadcast %390 : f32 to vector<1x128xf32>
    %392 = arith.mulf %376, %391 : vector<1x128xf32>
    %393 = arith.addf %389, %392 : vector<1x128xf32>
    %c34 = arith.constant 34 : index
    %394 = memref.load %arg1[%c34] : memref<80xf32, #tpu.memory_space<smem>>
    %395 = vector.broadcast %394 : f32 to vector<1x128xf32>
    %396 = arith.mulf %378, %395 : vector<1x128xf32>
    %397 = arith.addf %393, %396 : vector<1x128xf32>
    %c35 = arith.constant 35 : index
    %398 = memref.load %arg1[%c35] : memref<80xf32, #tpu.memory_space<smem>>
    %399 = vector.broadcast %398 : f32 to vector<1x128xf32>
    %400 = arith.mulf %370, %399 : vector<1x128xf32>
    %c36 = arith.constant 36 : index
    %401 = memref.load %arg1[%c36] : memref<80xf32, #tpu.memory_space<smem>>
    %402 = vector.broadcast %401 : f32 to vector<1x128xf32>
    %403 = arith.mulf %372, %402 : vector<1x128xf32>
    %404 = arith.addf %400, %403 : vector<1x128xf32>
    %c37 = arith.constant 37 : index
    %405 = memref.load %arg1[%c37] : memref<80xf32, #tpu.memory_space<smem>>
    %406 = vector.broadcast %405 : f32 to vector<1x128xf32>
    %407 = arith.mulf %374, %406 : vector<1x128xf32>
    %408 = arith.addf %404, %407 : vector<1x128xf32>
    %c38 = arith.constant 38 : index
    %409 = memref.load %arg1[%c38] : memref<80xf32, #tpu.memory_space<smem>>
    %410 = vector.broadcast %409 : f32 to vector<1x128xf32>
    %411 = arith.mulf %376, %410 : vector<1x128xf32>
    %412 = arith.addf %408, %411 : vector<1x128xf32>
    %c39 = arith.constant 39 : index
    %413 = memref.load %arg1[%c39] : memref<80xf32, #tpu.memory_space<smem>>
    %414 = vector.broadcast %413 : f32 to vector<1x128xf32>
    %415 = arith.mulf %378, %414 : vector<1x128xf32>
    %416 = arith.addf %412, %415 : vector<1x128xf32>
    %c30_199 = arith.constant 30 : index
    %417 = memref.load %arg1[%c30_199] : memref<80xf32, #tpu.memory_space<smem>>
    %418 = vector.broadcast %417 : f32 to vector<1x128xf32>
    %419 = arith.mulf %397, %418 : vector<1x128xf32>
    %c35_200 = arith.constant 35 : index
    %420 = memref.load %arg1[%c35_200] : memref<80xf32, #tpu.memory_space<smem>>
    %421 = vector.broadcast %420 : f32 to vector<1x128xf32>
    %422 = arith.mulf %416, %421 : vector<1x128xf32>
    %423 = arith.addf %419, %422 : vector<1x128xf32>
    %c15_201 = arith.constant 15 : index
    %424 = memref.load %arg2[%c15_201] : memref<40xf32, #tpu.memory_space<smem>>
    %425 = vector.broadcast %424 : f32 to vector<1x128xf32>
    %426 = arith.addf %423, %425 : vector<1x128xf32>
    %cst_202 = arith.constant 0.000000e+00 : f32
    %427 = vector.broadcast %cst_202 : f32 to vector<1x128xf32>
    %428 = arith.maximumf %426, %427 : vector<1x128xf32>
    %c3_203 = arith.constant 3 : index
    %c0_204 = arith.constant 0 : index
    %c0_205 = arith.constant 0 : index
    %c0_206 = arith.constant 0 : index
    %429 = vector.load %arg4[%c3_203, %c0_204, %c0_205, %c0_206] : memref<8x5x1x128xf32, #tpu.memory_space<vmem>>, vector<1x1x1x128xf32>
    %430 = vector.shape_cast %429 : vector<1x1x1x128xf32> to vector<1x128xf32>
    %431 = vector.shape_cast %428 : vector<1x128xf32> to vector<1x1x1x128xf32>
    tpu.vector_store %arg4[%c3_203, %c0_204, %c0_205, %c0_206], %431 {strides = array<i32>} : memref<8x5x1x128xf32, #tpu.memory_space<vmem>>, vector<1x1x1x128xf32>,
    %c31_207 = arith.constant 31 : index
    %432 = memref.load %arg1[%c31_207] : memref<80xf32, #tpu.memory_space<smem>>
    %433 = vector.broadcast %432 : f32 to vector<1x128xf32>
    %434 = arith.mulf %397, %433 : vector<1x128xf32>
    %c36_208 = arith.constant 36 : index
    %435 = memref.load %arg1[%c36_208] : memref<80xf32, #tpu.memory_space<smem>>
    %436 = vector.broadcast %435 : f32 to vector<1x128xf32>
    %437 = arith.mulf %416, %436 : vector<1x128xf32>
    %438 = arith.addf %434, %437 : vector<1x128xf32>
    %c16_209 = arith.constant 16 : index
    %439 = memref.load %arg2[%c16_209] : memref<40xf32, #tpu.memory_space<smem>>
    %440 = vector.broadcast %439 : f32 to vector<1x128xf32>
    %441 = arith.addf %438, %440 : vector<1x128xf32>
    %cst_210 = arith.constant 0.000000e+00 : f32
    %442 = vector.broadcast %cst_210 : f32 to vector<1x128xf32>
    %443 = arith.maximumf %441, %442 : vector<1x128xf32>
    %c3_211 = arith.constant 3 : index
    %c1_212 = arith.constant 1 : index
    %c0_213 = arith.constant 0 : index
    %c0_214 = arith.constant 0 : index
    %444 = vector.load %arg4[%c3_211, %c1_212, %c0_213, %c0_214] : memref<8x5x1x128xf32, #tpu.memory_space<vmem>>, vector<1x1x1x128xf32>
    %445 = vector.shape_cast %444 : vector<1x1x1x128xf32> to vector<1x128xf32>
    %446 = vector.shape_cast %443 : vector<1x128xf32> to vector<1x1x1x128xf32>
    tpu.vector_store %arg4[%c3_211, %c1_212, %c0_213, %c0_214], %446 {strides = array<i32>} : memref<8x5x1x128xf32, #tpu.memory_space<vmem>>, vector<1x1x1x128xf32>,
    %c32_215 = arith.constant 32 : index
    %447 = memref.load %arg1[%c32_215] : memref<80xf32, #tpu.memory_space<smem>>
    %448 = vector.broadcast %447 : f32 to vector<1x128xf32>
    %449 = arith.mulf %397, %448 : vector<1x128xf32>
    %c37_216 = arith.constant 37 : index
    %450 = memref.load %arg1[%c37_216] : memref<80xf32, #tpu.memory_space<smem>>
    %451 = vector.broadcast %450 : f32 to vector<1x128xf32>
    %452 = arith.mulf %416, %451 : vector<1x128xf32>
    %453 = arith.addf %449, %452 : vector<1x128xf32>
    %c17_217 = arith.constant 17 : index
    %454 = memref.load %arg2[%c17_217] : memref<40xf32, #tpu.memory_space<smem>>
    %455 = vector.broadcast %454 : f32 to vector<1x128xf32>
    %456 = arith.addf %453, %455 : vector<1x128xf32>
    %cst_218 = arith.constant 0.000000e+00 : f32
    %457 = vector.broadcast %cst_218 : f32 to vector<1x128xf32>
    %458 = arith.maximumf %456, %457 : vector<1x128xf32>
    %c3_219 = arith.constant 3 : index
    %c2_220 = arith.constant 2 : index
    %c0_221 = arith.constant 0 : index
    %c0_222 = arith.constant 0 : index
    %459 = vector.load %arg4[%c3_219, %c2_220, %c0_221, %c0_222] : memref<8x5x1x128xf32, #tpu.memory_space<vmem>>, vector<1x1x1x128xf32>
    %460 = vector.shape_cast %459 : vector<1x1x1x128xf32> to vector<1x128xf32>
    %461 = vector.shape_cast %458 : vector<1x128xf32> to vector<1x1x1x128xf32>
    tpu.vector_store %arg4[%c3_219, %c2_220, %c0_221, %c0_222], %461 {strides = array<i32>} : memref<8x5x1x128xf32, #tpu.memory_space<vmem>>, vector<1x1x1x128xf32>,
    %c33_223 = arith.constant 33 : index
    %462 = memref.load %arg1[%c33_223] : memref<80xf32, #tpu.memory_space<smem>>
    %463 = vector.broadcast %462 : f32 to vector<1x128xf32>
    %464 = arith.mulf %397, %463 : vector<1x128xf32>
    %c38_224 = arith.constant 38 : index
    %465 = memref.load %arg1[%c38_224] : memref<80xf32, #tpu.memory_space<smem>>
    %466 = vector.broadcast %465 : f32 to vector<1x128xf32>
    %467 = arith.mulf %416, %466 : vector<1x128xf32>
    %468 = arith.addf %464, %467 : vector<1x128xf32>
    %c18_225 = arith.constant 18 : index
    %469 = memref.load %arg2[%c18_225] : memref<40xf32, #tpu.memory_space<smem>>
    %470 = vector.broadcast %469 : f32 to vector<1x128xf32>
    %471 = arith.addf %468, %470 : vector<1x128xf32>
    %cst_226 = arith.constant 0.000000e+00 : f32
    %472 = vector.broadcast %cst_226 : f32 to vector<1x128xf32>
    %473 = arith.maximumf %471, %472 : vector<1x128xf32>
    %c3_227 = arith.constant 3 : index
    %c3_228 = arith.constant 3 : index
    %c0_229 = arith.constant 0 : index
    %c0_230 = arith.constant 0 : index
    %474 = vector.load %arg4[%c3_227, %c3_228, %c0_229, %c0_230] : memref<8x5x1x128xf32, #tpu.memory_space<vmem>>, vector<1x1x1x128xf32>
    %475 = vector.shape_cast %474 : vector<1x1x1x128xf32> to vector<1x128xf32>
    %476 = vector.shape_cast %473 : vector<1x128xf32> to vector<1x1x1x128xf32>
    tpu.vector_store %arg4[%c3_227, %c3_228, %c0_229, %c0_230], %476 {strides = array<i32>} : memref<8x5x1x128xf32, #tpu.memory_space<vmem>>, vector<1x1x1x128xf32>,
    %c34_231 = arith.constant 34 : index
    %477 = memref.load %arg1[%c34_231] : memref<80xf32, #tpu.memory_space<smem>>
    %478 = vector.broadcast %477 : f32 to vector<1x128xf32>
    %479 = arith.mulf %397, %478 : vector<1x128xf32>
    %c39_232 = arith.constant 39 : index
    %480 = memref.load %arg1[%c39_232] : memref<80xf32, #tpu.memory_space<smem>>
    %481 = vector.broadcast %480 : f32 to vector<1x128xf32>
    %482 = arith.mulf %416, %481 : vector<1x128xf32>
    %483 = arith.addf %479, %482 : vector<1x128xf32>
    %c19_233 = arith.constant 19 : index
    %484 = memref.load %arg2[%c19_233] : memref<40xf32, #tpu.memory_space<smem>>
    %485 = vector.broadcast %484 : f32 to vector<1x128xf32>
    %486 = arith.addf %483, %485 : vector<1x128xf32>
    %cst_234 = arith.constant 0.000000e+00 : f32
    %487 = vector.broadcast %cst_234 : f32 to vector<1x128xf32>
    %488 = arith.maximumf %486, %487 : vector<1x128xf32>
    %c3_235 = arith.constant 3 : index
    %c4_236 = arith.constant 4 : index
    %c0_237 = arith.constant 0 : index
    %c0_238 = arith.constant 0 : index
    %489 = vector.load %arg4[%c3_235, %c4_236, %c0_237, %c0_238] : memref<8x5x1x128xf32, #tpu.memory_space<vmem>>, vector<1x1x1x128xf32>
    %490 = vector.shape_cast %489 : vector<1x1x1x128xf32> to vector<1x128xf32>
    %491 = vector.shape_cast %488 : vector<1x128xf32> to vector<1x1x1x128xf32>
    tpu.vector_store %arg4[%c3_235, %c4_236, %c0_237, %c0_238], %491 {strides = array<i32>} : memref<8x5x1x128xf32, #tpu.memory_space<vmem>>, vector<1x1x1x128xf32>,
    %c4_239 = arith.constant 4 : index
    %c0_240 = arith.constant 0 : index
    %c0_241 = arith.constant 0 : index
    %c0_242 = arith.constant 0 : index
    %492 = vector.load %arg3[%c4_239, %c0_240, %c0_241, %c0_242] : memref<8x5x1x128xf32, #tpu.memory_space<vmem>>, vector<1x1x1x128xf32>
    %493 = vector.shape_cast %492 : vector<1x1x1x128xf32> to vector<1x128xf32>
    %c4_243 = arith.constant 4 : index
    %c1_244 = arith.constant 1 : index
    %c0_245 = arith.constant 0 : index
    %c0_246 = arith.constant 0 : index
    %494 = vector.load %arg3[%c4_243, %c1_244, %c0_245, %c0_246] : memref<8x5x1x128xf32, #tpu.memory_space<vmem>>, vector<1x1x1x128xf32>
    %495 = vector.shape_cast %494 : vector<1x1x1x128xf32> to vector<1x128xf32>
    %c4_247 = arith.constant 4 : index
    %c2_248 = arith.constant 2 : index
    %c0_249 = arith.constant 0 : index
    %c0_250 = arith.constant 0 : index
    %496 = vector.load %arg3[%c4_247, %c2_248, %c0_249, %c0_250] : memref<8x5x1x128xf32, #tpu.memory_space<vmem>>, vector<1x1x1x128xf32>
    %497 = vector.shape_cast %496 : vector<1x1x1x128xf32> to vector<1x128xf32>
    %c4_251 = arith.constant 4 : index
    %c3_252 = arith.constant 3 : index
    %c0_253 = arith.constant 0 : index
    %c0_254 = arith.constant 0 : index
    %498 = vector.load %arg3[%c4_251, %c3_252, %c0_253, %c0_254] : memref<8x5x1x128xf32, #tpu.memory_space<vmem>>, vector<1x1x1x128xf32>
    %499 = vector.shape_cast %498 : vector<1x1x1x128xf32> to vector<1x128xf32>
    %c4_255 = arith.constant 4 : index
    %c4_256 = arith.constant 4 : index
    %c0_257 = arith.constant 0 : index
    %c0_258 = arith.constant 0 : index
    %500 = vector.load %arg3[%c4_255, %c4_256, %c0_257, %c0_258] : memref<8x5x1x128xf32, #tpu.memory_space<vmem>>, vector<1x1x1x128xf32>
    %501 = vector.shape_cast %500 : vector<1x1x1x128xf32> to vector<1x128xf32>
    %c40 = arith.constant 40 : index
    %502 = memref.load %arg1[%c40] : memref<80xf32, #tpu.memory_space<smem>>
    %503 = vector.broadcast %502 : f32 to vector<1x128xf32>
    %504 = arith.mulf %493, %503 : vector<1x128xf32>
    %c41 = arith.constant 41 : index
    %505 = memref.load %arg1[%c41] : memref<80xf32, #tpu.memory_space<smem>>
    %506 = vector.broadcast %505 : f32 to vector<1x128xf32>
    %507 = arith.mulf %495, %506 : vector<1x128xf32>
    %508 = arith.addf %504, %507 : vector<1x128xf32>
    %c42 = arith.constant 42 : index
    %509 = memref.load %arg1[%c42] : memref<80xf32, #tpu.memory_space<smem>>
    %510 = vector.broadcast %509 : f32 to vector<1x128xf32>
    %511 = arith.mulf %497, %510 : vector<1x128xf32>
    %512 = arith.addf %508, %511 : vector<1x128xf32>
    %c43 = arith.constant 43 : index
    %513 = memref.load %arg1[%c43] : memref<80xf32, #tpu.memory_space<smem>>
    %514 = vector.broadcast %513 : f32 to vector<1x128xf32>
    %515 = arith.mulf %499, %514 : vector<1x128xf32>
    %516 = arith.addf %512, %515 : vector<1x128xf32>
    %c44 = arith.constant 44 : index
    %517 = memref.load %arg1[%c44] : memref<80xf32, #tpu.memory_space<smem>>
    %518 = vector.broadcast %517 : f32 to vector<1x128xf32>
    %519 = arith.mulf %501, %518 : vector<1x128xf32>
    %520 = arith.addf %516, %519 : vector<1x128xf32>
    %c45 = arith.constant 45 : index
    %521 = memref.load %arg1[%c45] : memref<80xf32, #tpu.memory_space<smem>>
    %522 = vector.broadcast %521 : f32 to vector<1x128xf32>
    %523 = arith.mulf %493, %522 : vector<1x128xf32>
    %c46 = arith.constant 46 : index
    %524 = memref.load %arg1[%c46] : memref<80xf32, #tpu.memory_space<smem>>
    %525 = vector.broadcast %524 : f32 to vector<1x128xf32>
    %526 = arith.mulf %495, %525 : vector<1x128xf32>
    %527 = arith.addf %523, %526 : vector<1x128xf32>
    %c47 = arith.constant 47 : index
    %528 = memref.load %arg1[%c47] : memref<80xf32, #tpu.memory_space<smem>>
    %529 = vector.broadcast %528 : f32 to vector<1x128xf32>
    %530 = arith.mulf %497, %529 : vector<1x128xf32>
    %531 = arith.addf %527, %530 : vector<1x128xf32>
    %c48 = arith.constant 48 : index
    %532 = memref.load %arg1[%c48] : memref<80xf32, #tpu.memory_space<smem>>
    %533 = vector.broadcast %532 : f32 to vector<1x128xf32>
    %534 = arith.mulf %499, %533 : vector<1x128xf32>
    %535 = arith.addf %531, %534 : vector<1x128xf32>
    %c49 = arith.constant 49 : index
    %536 = memref.load %arg1[%c49] : memref<80xf32, #tpu.memory_space<smem>>
    %537 = vector.broadcast %536 : f32 to vector<1x128xf32>
    %538 = arith.mulf %501, %537 : vector<1x128xf32>
    %539 = arith.addf %535, %538 : vector<1x128xf32>
    %c40_259 = arith.constant 40 : index
    %540 = memref.load %arg1[%c40_259] : memref<80xf32, #tpu.memory_space<smem>>
    %541 = vector.broadcast %540 : f32 to vector<1x128xf32>
    %542 = arith.mulf %520, %541 : vector<1x128xf32>
    %c45_260 = arith.constant 45 : index
    %543 = memref.load %arg1[%c45_260] : memref<80xf32, #tpu.memory_space<smem>>
    %544 = vector.broadcast %543 : f32 to vector<1x128xf32>
    %545 = arith.mulf %539, %544 : vector<1x128xf32>
    %546 = arith.addf %542, %545 : vector<1x128xf32>
    %c20_261 = arith.constant 20 : index
    %547 = memref.load %arg2[%c20_261] : memref<40xf32, #tpu.memory_space<smem>>
    %548 = vector.broadcast %547 : f32 to vector<1x128xf32>
    %549 = arith.addf %546, %548 : vector<1x128xf32>
    %cst_262 = arith.constant 0.000000e+00 : f32
    %550 = vector.broadcast %cst_262 : f32 to vector<1x128xf32>
    %551 = arith.maximumf %549, %550 : vector<1x128xf32>
    %c4_263 = arith.constant 4 : index
    %c0_264 = arith.constant 0 : index
    %c0_265 = arith.constant 0 : index
    %c0_266 = arith.constant 0 : index
    %552 = vector.load %arg4[%c4_263, %c0_264, %c0_265, %c0_266] : memref<8x5x1x128xf32, #tpu.memory_space<vmem>>, vector<1x1x1x128xf32>
    %553 = vector.shape_cast %552 : vector<1x1x1x128xf32> to vector<1x128xf32>
    %554 = vector.shape_cast %551 : vector<1x128xf32> to vector<1x1x1x128xf32>
    tpu.vector_store %arg4[%c4_263, %c0_264, %c0_265, %c0_266], %554 {strides = array<i32>} : memref<8x5x1x128xf32, #tpu.memory_space<vmem>>, vector<1x1x1x128xf32>,
    %c41_267 = arith.constant 41 : index
    %555 = memref.load %arg1[%c41_267] : memref<80xf32, #tpu.memory_space<smem>>
    %556 = vector.broadcast %555 : f32 to vector<1x128xf32>
    %557 = arith.mulf %520, %556 : vector<1x128xf32>
    %c46_268 = arith.constant 46 : index
    %558 = memref.load %arg1[%c46_268] : memref<80xf32, #tpu.memory_space<smem>>
    %559 = vector.broadcast %558 : f32 to vector<1x128xf32>
    %560 = arith.mulf %539, %559 : vector<1x128xf32>
    %561 = arith.addf %557, %560 : vector<1x128xf32>
    %c21_269 = arith.constant 21 : index
    %562 = memref.load %arg2[%c21_269] : memref<40xf32, #tpu.memory_space<smem>>
    %563 = vector.broadcast %562 : f32 to vector<1x128xf32>
    %564 = arith.addf %561, %563 : vector<1x128xf32>
    %cst_270 = arith.constant 0.000000e+00 : f32
    %565 = vector.broadcast %cst_270 : f32 to vector<1x128xf32>
    %566 = arith.maximumf %564, %565 : vector<1x128xf32>
    %c4_271 = arith.constant 4 : index
    %c1_272 = arith.constant 1 : index
    %c0_273 = arith.constant 0 : index
    %c0_274 = arith.constant 0 : index
    %567 = vector.load %arg4[%c4_271, %c1_272, %c0_273, %c0_274] : memref<8x5x1x128xf32, #tpu.memory_space<vmem>>, vector<1x1x1x128xf32>
    %568 = vector.shape_cast %567 : vector<1x1x1x128xf32> to vector<1x128xf32>
    %569 = vector.shape_cast %566 : vector<1x128xf32> to vector<1x1x1x128xf32>
    tpu.vector_store %arg4[%c4_271, %c1_272, %c0_273, %c0_274], %569 {strides = array<i32>} : memref<8x5x1x128xf32, #tpu.memory_space<vmem>>, vector<1x1x1x128xf32>,
    %c42_275 = arith.constant 42 : index
    %570 = memref.load %arg1[%c42_275] : memref<80xf32, #tpu.memory_space<smem>>
    %571 = vector.broadcast %570 : f32 to vector<1x128xf32>
    %572 = arith.mulf %520, %571 : vector<1x128xf32>
    %c47_276 = arith.constant 47 : index
    %573 = memref.load %arg1[%c47_276] : memref<80xf32, #tpu.memory_space<smem>>
    %574 = vector.broadcast %573 : f32 to vector<1x128xf32>
    %575 = arith.mulf %539, %574 : vector<1x128xf32>
    %576 = arith.addf %572, %575 : vector<1x128xf32>
    %c22_277 = arith.constant 22 : index
    %577 = memref.load %arg2[%c22_277] : memref<40xf32, #tpu.memory_space<smem>>
    %578 = vector.broadcast %577 : f32 to vector<1x128xf32>
    %579 = arith.addf %576, %578 : vector<1x128xf32>
    %cst_278 = arith.constant 0.000000e+00 : f32
    %580 = vector.broadcast %cst_278 : f32 to vector<1x128xf32>
    %581 = arith.maximumf %579, %580 : vector<1x128xf32>
    %c4_279 = arith.constant 4 : index
    %c2_280 = arith.constant 2 : index
    %c0_281 = arith.constant 0 : index
    %c0_282 = arith.constant 0 : index
    %582 = vector.load %arg4[%c4_279, %c2_280, %c0_281, %c0_282] : memref<8x5x1x128xf32, #tpu.memory_space<vmem>>, vector<1x1x1x128xf32>
    %583 = vector.shape_cast %582 : vector<1x1x1x128xf32> to vector<1x128xf32>
    %584 = vector.shape_cast %581 : vector<1x128xf32> to vector<1x1x1x128xf32>
    tpu.vector_store %arg4[%c4_279, %c2_280, %c0_281, %c0_282], %584 {strides = array<i32>} : memref<8x5x1x128xf32, #tpu.memory_space<vmem>>, vector<1x1x1x128xf32>,
    %c43_283 = arith.constant 43 : index
    %585 = memref.load %arg1[%c43_283] : memref<80xf32, #tpu.memory_space<smem>>
    %586 = vector.broadcast %585 : f32 to vector<1x128xf32>
    %587 = arith.mulf %520, %586 : vector<1x128xf32>
    %c48_284 = arith.constant 48 : index
    %588 = memref.load %arg1[%c48_284] : memref<80xf32, #tpu.memory_space<smem>>
    %589 = vector.broadcast %588 : f32 to vector<1x128xf32>
    %590 = arith.mulf %539, %589 : vector<1x128xf32>
    %591 = arith.addf %587, %590 : vector<1x128xf32>
    %c23_285 = arith.constant 23 : index
    %592 = memref.load %arg2[%c23_285] : memref<40xf32, #tpu.memory_space<smem>>
    %593 = vector.broadcast %592 : f32 to vector<1x128xf32>
    %594 = arith.addf %591, %593 : vector<1x128xf32>
    %cst_286 = arith.constant 0.000000e+00 : f32
    %595 = vector.broadcast %cst_286 : f32 to vector<1x128xf32>
    %596 = arith.maximumf %594, %595 : vector<1x128xf32>
    %c4_287 = arith.constant 4 : index
    %c3_288 = arith.constant 3 : index
    %c0_289 = arith.constant 0 : index
    %c0_290 = arith.constant 0 : index
    %597 = vector.load %arg4[%c4_287, %c3_288, %c0_289, %c0_290] : memref<8x5x1x128xf32, #tpu.memory_space<vmem>>, vector<1x1x1x128xf32>
    %598 = vector.shape_cast %597 : vector<1x1x1x128xf32> to vector<1x128xf32>
    %599 = vector.shape_cast %596 : vector<1x128xf32> to vector<1x1x1x128xf32>
    tpu.vector_store %arg4[%c4_287, %c3_288, %c0_289, %c0_290], %599 {strides = array<i32>} : memref<8x5x1x128xf32, #tpu.memory_space<vmem>>, vector<1x1x1x128xf32>,
    %c44_291 = arith.constant 44 : index
    %600 = memref.load %arg1[%c44_291] : memref<80xf32, #tpu.memory_space<smem>>
    %601 = vector.broadcast %600 : f32 to vector<1x128xf32>
    %602 = arith.mulf %520, %601 : vector<1x128xf32>
    %c49_292 = arith.constant 49 : index
    %603 = memref.load %arg1[%c49_292] : memref<80xf32, #tpu.memory_space<smem>>
    %604 = vector.broadcast %603 : f32 to vector<1x128xf32>
    %605 = arith.mulf %539, %604 : vector<1x128xf32>
    %606 = arith.addf %602, %605 : vector<1x128xf32>
    %c24_293 = arith.constant 24 : index
    %607 = memref.load %arg2[%c24_293] : memref<40xf32, #tpu.memory_space<smem>>
    %608 = vector.broadcast %607 : f32 to vector<1x128xf32>
    %609 = arith.addf %606, %608 : vector<1x128xf32>
    %cst_294 = arith.constant 0.000000e+00 : f32
    %610 = vector.broadcast %cst_294 : f32 to vector<1x128xf32>
    %611 = arith.maximumf %609, %610 : vector<1x128xf32>
    %c4_295 = arith.constant 4 : index
    %c4_296 = arith.constant 4 : index
    %c0_297 = arith.constant 0 : index
    %c0_298 = arith.constant 0 : index
    %612 = vector.load %arg4[%c4_295, %c4_296, %c0_297, %c0_298] : memref<8x5x1x128xf32, #tpu.memory_space<vmem>>, vector<1x1x1x128xf32>
    %613 = vector.shape_cast %612 : vector<1x1x1x128xf32> to vector<1x128xf32>
    %614 = vector.shape_cast %611 : vector<1x128xf32> to vector<1x1x1x128xf32>
    tpu.vector_store %arg4[%c4_295, %c4_296, %c0_297, %c0_298], %614 {strides = array<i32>} : memref<8x5x1x128xf32, #tpu.memory_space<vmem>>, vector<1x1x1x128xf32>,
    %c5_299 = arith.constant 5 : index
    %c0_300 = arith.constant 0 : index
    %c0_301 = arith.constant 0 : index
    %c0_302 = arith.constant 0 : index
    %615 = vector.load %arg3[%c5_299, %c0_300, %c0_301, %c0_302] : memref<8x5x1x128xf32, #tpu.memory_space<vmem>>, vector<1x1x1x128xf32>
    %616 = vector.shape_cast %615 : vector<1x1x1x128xf32> to vector<1x128xf32>
    %c5_303 = arith.constant 5 : index
    %c1_304 = arith.constant 1 : index
    %c0_305 = arith.constant 0 : index
    %c0_306 = arith.constant 0 : index
    %617 = vector.load %arg3[%c5_303, %c1_304, %c0_305, %c0_306] : memref<8x5x1x128xf32, #tpu.memory_space<vmem>>, vector<1x1x1x128xf32>
    %618 = vector.shape_cast %617 : vector<1x1x1x128xf32> to vector<1x128xf32>
    %c5_307 = arith.constant 5 : index
    %c2_308 = arith.constant 2 : index
    %c0_309 = arith.constant 0 : index
    %c0_310 = arith.constant 0 : index
    %619 = vector.load %arg3[%c5_307, %c2_308, %c0_309, %c0_310] : memref<8x5x1x128xf32, #tpu.memory_space<vmem>>, vector<1x1x1x128xf32>
    %620 = vector.shape_cast %619 : vector<1x1x1x128xf32> to vector<1x128xf32>
    %c5_311 = arith.constant 5 : index
    %c3_312 = arith.constant 3 : index
    %c0_313 = arith.constant 0 : index
    %c0_314 = arith.constant 0 : index
    %621 = vector.load %arg3[%c5_311, %c3_312, %c0_313, %c0_314] : memref<8x5x1x128xf32, #tpu.memory_space<vmem>>, vector<1x1x1x128xf32>
    %622 = vector.shape_cast %621 : vector<1x1x1x128xf32> to vector<1x128xf32>
    %c5_315 = arith.constant 5 : index
    %c4_316 = arith.constant 4 : index
    %c0_317 = arith.constant 0 : index
    %c0_318 = arith.constant 0 : index
    %623 = vector.load %arg3[%c5_315, %c4_316, %c0_317, %c0_318] : memref<8x5x1x128xf32, #tpu.memory_space<vmem>>, vector<1x1x1x128xf32>
    %624 = vector.shape_cast %623 : vector<1x1x1x128xf32> to vector<1x128xf32>
    %c50 = arith.constant 50 : index
    %625 = memref.load %arg1[%c50] : memref<80xf32, #tpu.memory_space<smem>>
    %626 = vector.broadcast %625 : f32 to vector<1x128xf32>
    %627 = arith.mulf %616, %626 : vector<1x128xf32>
    %c51 = arith.constant 51 : index
    %628 = memref.load %arg1[%c51] : memref<80xf32, #tpu.memory_space<smem>>
    %629 = vector.broadcast %628 : f32 to vector<1x128xf32>
    %630 = arith.mulf %618, %629 : vector<1x128xf32>
    %631 = arith.addf %627, %630 : vector<1x128xf32>
    %c52 = arith.constant 52 : index
    %632 = memref.load %arg1[%c52] : memref<80xf32, #tpu.memory_space<smem>>
    %633 = vector.broadcast %632 : f32 to vector<1x128xf32>
    %634 = arith.mulf %620, %633 : vector<1x128xf32>
    %635 = arith.addf %631, %634 : vector<1x128xf32>
    %c53 = arith.constant 53 : index
    %636 = memref.load %arg1[%c53] : memref<80xf32, #tpu.memory_space<smem>>
    %637 = vector.broadcast %636 : f32 to vector<1x128xf32>
    %638 = arith.mulf %622, %637 : vector<1x128xf32>
    %639 = arith.addf %635, %638 : vector<1x128xf32>
    %c54 = arith.constant 54 : index
    %640 = memref.load %arg1[%c54] : memref<80xf32, #tpu.memory_space<smem>>
    %641 = vector.broadcast %640 : f32 to vector<1x128xf32>
    %642 = arith.mulf %624, %641 : vector<1x128xf32>
    %643 = arith.addf %639, %642 : vector<1x128xf32>
    %c55 = arith.constant 55 : index
    %644 = memref.load %arg1[%c55] : memref<80xf32, #tpu.memory_space<smem>>
    %645 = vector.broadcast %644 : f32 to vector<1x128xf32>
    %646 = arith.mulf %616, %645 : vector<1x128xf32>
    %c56 = arith.constant 56 : index
    %647 = memref.load %arg1[%c56] : memref<80xf32, #tpu.memory_space<smem>>
    %648 = vector.broadcast %647 : f32 to vector<1x128xf32>
    %649 = arith.mulf %618, %648 : vector<1x128xf32>
    %650 = arith.addf %646, %649 : vector<1x128xf32>
    %c57 = arith.constant 57 : index
    %651 = memref.load %arg1[%c57] : memref<80xf32, #tpu.memory_space<smem>>
    %652 = vector.broadcast %651 : f32 to vector<1x128xf32>
    %653 = arith.mulf %620, %652 : vector<1x128xf32>
    %654 = arith.addf %650, %653 : vector<1x128xf32>
    %c58 = arith.constant 58 : index
    %655 = memref.load %arg1[%c58] : memref<80xf32, #tpu.memory_space<smem>>
    %656 = vector.broadcast %655 : f32 to vector<1x128xf32>
    %657 = arith.mulf %622, %656 : vector<1x128xf32>
    %658 = arith.addf %654, %657 : vector<1x128xf32>
    %c59 = arith.constant 59 : index
    %659 = memref.load %arg1[%c59] : memref<80xf32, #tpu.memory_space<smem>>
    %660 = vector.broadcast %659 : f32 to vector<1x128xf32>
    %661 = arith.mulf %624, %660 : vector<1x128xf32>
    %662 = arith.addf %658, %661 : vector<1x128xf32>
    %c50_319 = arith.constant 50 : index
    %663 = memref.load %arg1[%c50_319] : memref<80xf32, #tpu.memory_space<smem>>
    %664 = vector.broadcast %663 : f32 to vector<1x128xf32>
    %665 = arith.mulf %643, %664 : vector<1x128xf32>
    %c55_320 = arith.constant 55 : index
    %666 = memref.load %arg1[%c55_320] : memref<80xf32, #tpu.memory_space<smem>>
    %667 = vector.broadcast %666 : f32 to vector<1x128xf32>
    %668 = arith.mulf %662, %667 : vector<1x128xf32>
    %669 = arith.addf %665, %668 : vector<1x128xf32>
    %c25_321 = arith.constant 25 : index
    %670 = memref.load %arg2[%c25_321] : memref<40xf32, #tpu.memory_space<smem>>
    %671 = vector.broadcast %670 : f32 to vector<1x128xf32>
    %672 = arith.addf %669, %671 : vector<1x128xf32>
    %cst_322 = arith.constant 0.000000e+00 : f32
    %673 = vector.broadcast %cst_322 : f32 to vector<1x128xf32>
    %674 = arith.maximumf %672, %673 : vector<1x128xf32>
    %c5_323 = arith.constant 5 : index
    %c0_324 = arith.constant 0 : index
    %c0_325 = arith.constant 0 : index
    %c0_326 = arith.constant 0 : index
    %675 = vector.load %arg4[%c5_323, %c0_324, %c0_325, %c0_326] : memref<8x5x1x128xf32, #tpu.memory_space<vmem>>, vector<1x1x1x128xf32>
    %676 = vector.shape_cast %675 : vector<1x1x1x128xf32> to vector<1x128xf32>
    %677 = vector.shape_cast %674 : vector<1x128xf32> to vector<1x1x1x128xf32>
    tpu.vector_store %arg4[%c5_323, %c0_324, %c0_325, %c0_326], %677 {strides = array<i32>} : memref<8x5x1x128xf32, #tpu.memory_space<vmem>>, vector<1x1x1x128xf32>,
    %c51_327 = arith.constant 51 : index
    %678 = memref.load %arg1[%c51_327] : memref<80xf32, #tpu.memory_space<smem>>
    %679 = vector.broadcast %678 : f32 to vector<1x128xf32>
    %680 = arith.mulf %643, %679 : vector<1x128xf32>
    %c56_328 = arith.constant 56 : index
    %681 = memref.load %arg1[%c56_328] : memref<80xf32, #tpu.memory_space<smem>>
    %682 = vector.broadcast %681 : f32 to vector<1x128xf32>
    %683 = arith.mulf %662, %682 : vector<1x128xf32>
    %684 = arith.addf %680, %683 : vector<1x128xf32>
    %c26_329 = arith.constant 26 : index
    %685 = memref.load %arg2[%c26_329] : memref<40xf32, #tpu.memory_space<smem>>
    %686 = vector.broadcast %685 : f32 to vector<1x128xf32>
    %687 = arith.addf %684, %686 : vector<1x128xf32>
    %cst_330 = arith.constant 0.000000e+00 : f32
    %688 = vector.broadcast %cst_330 : f32 to vector<1x128xf32>
    %689 = arith.maximumf %687, %688 : vector<1x128xf32>
    %c5_331 = arith.constant 5 : index
    %c1_332 = arith.constant 1 : index
    %c0_333 = arith.constant 0 : index
    %c0_334 = arith.constant 0 : index
    %690 = vector.load %arg4[%c5_331, %c1_332, %c0_333, %c0_334] : memref<8x5x1x128xf32, #tpu.memory_space<vmem>>, vector<1x1x1x128xf32>
    %691 = vector.shape_cast %690 : vector<1x1x1x128xf32> to vector<1x128xf32>
    %692 = vector.shape_cast %689 : vector<1x128xf32> to vector<1x1x1x128xf32>
    tpu.vector_store %arg4[%c5_331, %c1_332, %c0_333, %c0_334], %692 {strides = array<i32>} : memref<8x5x1x128xf32, #tpu.memory_space<vmem>>, vector<1x1x1x128xf32>,
    %c52_335 = arith.constant 52 : index
    %693 = memref.load %arg1[%c52_335] : memref<80xf32, #tpu.memory_space<smem>>
    %694 = vector.broadcast %693 : f32 to vector<1x128xf32>
    %695 = arith.mulf %643, %694 : vector<1x128xf32>
    %c57_336 = arith.constant 57 : index
    %696 = memref.load %arg1[%c57_336] : memref<80xf32, #tpu.memory_space<smem>>
    %697 = vector.broadcast %696 : f32 to vector<1x128xf32>
    %698 = arith.mulf %662, %697 : vector<1x128xf32>
    %699 = arith.addf %695, %698 : vector<1x128xf32>
    %c27_337 = arith.constant 27 : index
    %700 = memref.load %arg2[%c27_337] : memref<40xf32, #tpu.memory_space<smem>>
    %701 = vector.broadcast %700 : f32 to vector<1x128xf32>
    %702 = arith.addf %699, %701 : vector<1x128xf32>
    %cst_338 = arith.constant 0.000000e+00 : f32
    %703 = vector.broadcast %cst_338 : f32 to vector<1x128xf32>
    %704 = arith.maximumf %702, %703 : vector<1x128xf32>
    %c5_339 = arith.constant 5 : index
    %c2_340 = arith.constant 2 : index
    %c0_341 = arith.constant 0 : index
    %c0_342 = arith.constant 0 : index
    %705 = vector.load %arg4[%c5_339, %c2_340, %c0_341, %c0_342] : memref<8x5x1x128xf32, #tpu.memory_space<vmem>>, vector<1x1x1x128xf32>
    %706 = vector.shape_cast %705 : vector<1x1x1x128xf32> to vector<1x128xf32>
    %707 = vector.shape_cast %704 : vector<1x128xf32> to vector<1x1x1x128xf32>
    tpu.vector_store %arg4[%c5_339, %c2_340, %c0_341, %c0_342], %707 {strides = array<i32>} : memref<8x5x1x128xf32, #tpu.memory_space<vmem>>, vector<1x1x1x128xf32>,
    %c53_343 = arith.constant 53 : index
    %708 = memref.load %arg1[%c53_343] : memref<80xf32, #tpu.memory_space<smem>>
    %709 = vector.broadcast %708 : f32 to vector<1x128xf32>
    %710 = arith.mulf %643, %709 : vector<1x128xf32>
    %c58_344 = arith.constant 58 : index
    %711 = memref.load %arg1[%c58_344] : memref<80xf32, #tpu.memory_space<smem>>
    %712 = vector.broadcast %711 : f32 to vector<1x128xf32>
    %713 = arith.mulf %662, %712 : vector<1x128xf32>
    %714 = arith.addf %710, %713 : vector<1x128xf32>
    %c28_345 = arith.constant 28 : index
    %715 = memref.load %arg2[%c28_345] : memref<40xf32, #tpu.memory_space<smem>>
    %716 = vector.broadcast %715 : f32 to vector<1x128xf32>
    %717 = arith.addf %714, %716 : vector<1x128xf32>
    %cst_346 = arith.constant 0.000000e+00 : f32
    %718 = vector.broadcast %cst_346 : f32 to vector<1x128xf32>
    %719 = arith.maximumf %717, %718 : vector<1x128xf32>
    %c5_347 = arith.constant 5 : index
    %c3_348 = arith.constant 3 : index
    %c0_349 = arith.constant 0 : index
    %c0_350 = arith.constant 0 : index
    %720 = vector.load %arg4[%c5_347, %c3_348, %c0_349, %c0_350] : memref<8x5x1x128xf32, #tpu.memory_space<vmem>>, vector<1x1x1x128xf32>
    %721 = vector.shape_cast %720 : vector<1x1x1x128xf32> to vector<1x128xf32>
    %722 = vector.shape_cast %719 : vector<1x128xf32> to vector<1x1x1x128xf32>
    tpu.vector_store %arg4[%c5_347, %c3_348, %c0_349, %c0_350], %722 {strides = array<i32>} : memref<8x5x1x128xf32, #tpu.memory_space<vmem>>, vector<1x1x1x128xf32>,
    %c54_351 = arith.constant 54 : index
    %723 = memref.load %arg1[%c54_351] : memref<80xf32, #tpu.memory_space<smem>>
    %724 = vector.broadcast %723 : f32 to vector<1x128xf32>
    %725 = arith.mulf %643, %724 : vector<1x128xf32>
    %c59_352 = arith.constant 59 : index
    %726 = memref.load %arg1[%c59_352] : memref<80xf32, #tpu.memory_space<smem>>
    %727 = vector.broadcast %726 : f32 to vector<1x128xf32>
    %728 = arith.mulf %662, %727 : vector<1x128xf32>
    %729 = arith.addf %725, %728 : vector<1x128xf32>
    %c29_353 = arith.constant 29 : index
    %730 = memref.load %arg2[%c29_353] : memref<40xf32, #tpu.memory_space<smem>>
    %731 = vector.broadcast %730 : f32 to vector<1x128xf32>
    %732 = arith.addf %729, %731 : vector<1x128xf32>
    %cst_354 = arith.constant 0.000000e+00 : f32
    %733 = vector.broadcast %cst_354 : f32 to vector<1x128xf32>
    %734 = arith.maximumf %732, %733 : vector<1x128xf32>
    %c5_355 = arith.constant 5 : index
    %c4_356 = arith.constant 4 : index
    %c0_357 = arith.constant 0 : index
    %c0_358 = arith.constant 0 : index
    %735 = vector.load %arg4[%c5_355, %c4_356, %c0_357, %c0_358] : memref<8x5x1x128xf32, #tpu.memory_space<vmem>>, vector<1x1x1x128xf32>
    %736 = vector.shape_cast %735 : vector<1x1x1x128xf32> to vector<1x128xf32>
    %737 = vector.shape_cast %734 : vector<1x128xf32> to vector<1x1x1x128xf32>
    tpu.vector_store %arg4[%c5_355, %c4_356, %c0_357, %c0_358], %737 {strides = array<i32>} : memref<8x5x1x128xf32, #tpu.memory_space<vmem>>, vector<1x1x1x128xf32>,
    %c6_359 = arith.constant 6 : index
    %c0_360 = arith.constant 0 : index
    %c0_361 = arith.constant 0 : index
    %c0_362 = arith.constant 0 : index
    %738 = vector.load %arg3[%c6_359, %c0_360, %c0_361, %c0_362] : memref<8x5x1x128xf32, #tpu.memory_space<vmem>>, vector<1x1x1x128xf32>
    %739 = vector.shape_cast %738 : vector<1x1x1x128xf32> to vector<1x128xf32>
    %c6_363 = arith.constant 6 : index
    %c1_364 = arith.constant 1 : index
    %c0_365 = arith.constant 0 : index
    %c0_366 = arith.constant 0 : index
    %740 = vector.load %arg3[%c6_363, %c1_364, %c0_365, %c0_366] : memref<8x5x1x128xf32, #tpu.memory_space<vmem>>, vector<1x1x1x128xf32>
    %741 = vector.shape_cast %740 : vector<1x1x1x128xf32> to vector<1x128xf32>
    %c6_367 = arith.constant 6 : index
    %c2_368 = arith.constant 2 : index
    %c0_369 = arith.constant 0 : index
    %c0_370 = arith.constant 0 : index
    %742 = vector.load %arg3[%c6_367, %c2_368, %c0_369, %c0_370] : memref<8x5x1x128xf32, #tpu.memory_space<vmem>>, vector<1x1x1x128xf32>
    %743 = vector.shape_cast %742 : vector<1x1x1x128xf32> to vector<1x128xf32>
    %c6_371 = arith.constant 6 : index
    %c3_372 = arith.constant 3 : index
    %c0_373 = arith.constant 0 : index
    %c0_374 = arith.constant 0 : index
    %744 = vector.load %arg3[%c6_371, %c3_372, %c0_373, %c0_374] : memref<8x5x1x128xf32, #tpu.memory_space<vmem>>, vector<1x1x1x128xf32>
    %745 = vector.shape_cast %744 : vector<1x1x1x128xf32> to vector<1x128xf32>
    %c6_375 = arith.constant 6 : index
    %c4_376 = arith.constant 4 : index
    %c0_377 = arith.constant 0 : index
    %c0_378 = arith.constant 0 : index
    %746 = vector.load %arg3[%c6_375, %c4_376, %c0_377, %c0_378] : memref<8x5x1x128xf32, #tpu.memory_space<vmem>>, vector<1x1x1x128xf32>
    %747 = vector.shape_cast %746 : vector<1x1x1x128xf32> to vector<1x128xf32>
    %c60 = arith.constant 60 : index
    %748 = memref.load %arg1[%c60] : memref<80xf32, #tpu.memory_space<smem>>
    %749 = vector.broadcast %748 : f32 to vector<1x128xf32>
    %750 = arith.mulf %739, %749 : vector<1x128xf32>
    %c61 = arith.constant 61 : index
    %751 = memref.load %arg1[%c61] : memref<80xf32, #tpu.memory_space<smem>>
    %752 = vector.broadcast %751 : f32 to vector<1x128xf32>
    %753 = arith.mulf %741, %752 : vector<1x128xf32>
    %754 = arith.addf %750, %753 : vector<1x128xf32>
    %c62 = arith.constant 62 : index
    %755 = memref.load %arg1[%c62] : memref<80xf32, #tpu.memory_space<smem>>
    %756 = vector.broadcast %755 : f32 to vector<1x128xf32>
    %757 = arith.mulf %743, %756 : vector<1x128xf32>
    %758 = arith.addf %754, %757 : vector<1x128xf32>
    %c63 = arith.constant 63 : index
    %759 = memref.load %arg1[%c63] : memref<80xf32, #tpu.memory_space<smem>>
    %760 = vector.broadcast %759 : f32 to vector<1x128xf32>
    %761 = arith.mulf %745, %760 : vector<1x128xf32>
    %762 = arith.addf %758, %761 : vector<1x128xf32>
    %c64 = arith.constant 64 : index
    %763 = memref.load %arg1[%c64] : memref<80xf32, #tpu.memory_space<smem>>
    %764 = vector.broadcast %763 : f32 to vector<1x128xf32>
    %765 = arith.mulf %747, %764 : vector<1x128xf32>
    %766 = arith.addf %762, %765 : vector<1x128xf32>
    %c65 = arith.constant 65 : index
    %767 = memref.load %arg1[%c65] : memref<80xf32, #tpu.memory_space<smem>>
    %768 = vector.broadcast %767 : f32 to vector<1x128xf32>
    %769 = arith.mulf %739, %768 : vector<1x128xf32>
    %c66 = arith.constant 66 : index
    %770 = memref.load %arg1[%c66] : memref<80xf32, #tpu.memory_space<smem>>
    %771 = vector.broadcast %770 : f32 to vector<1x128xf32>
    %772 = arith.mulf %741, %771 : vector<1x128xf32>
    %773 = arith.addf %769, %772 : vector<1x128xf32>
    %c67 = arith.constant 67 : index
    %774 = memref.load %arg1[%c67] : memref<80xf32, #tpu.memory_space<smem>>
    %775 = vector.broadcast %774 : f32 to vector<1x128xf32>
    %776 = arith.mulf %743, %775 : vector<1x128xf32>
    %777 = arith.addf %773, %776 : vector<1x128xf32>
    %c68 = arith.constant 68 : index
    %778 = memref.load %arg1[%c68] : memref<80xf32, #tpu.memory_space<smem>>
    %779 = vector.broadcast %778 : f32 to vector<1x128xf32>
    %780 = arith.mulf %745, %779 : vector<1x128xf32>
    %781 = arith.addf %777, %780 : vector<1x128xf32>
    %c69 = arith.constant 69 : index
    %782 = memref.load %arg1[%c69] : memref<80xf32, #tpu.memory_space<smem>>
    %783 = vector.broadcast %782 : f32 to vector<1x128xf32>
    %784 = arith.mulf %747, %783 : vector<1x128xf32>
    %785 = arith.addf %781, %784 : vector<1x128xf32>
    %c60_379 = arith.constant 60 : index
    %786 = memref.load %arg1[%c60_379] : memref<80xf32, #tpu.memory_space<smem>>
    %787 = vector.broadcast %786 : f32 to vector<1x128xf32>
    %788 = arith.mulf %766, %787 : vector<1x128xf32>
    %c65_380 = arith.constant 65 : index
    %789 = memref.load %arg1[%c65_380] : memref<80xf32, #tpu.memory_space<smem>>
    %790 = vector.broadcast %789 : f32 to vector<1x128xf32>
    %791 = arith.mulf %785, %790 : vector<1x128xf32>
    %792 = arith.addf %788, %791 : vector<1x128xf32>
    %c30_381 = arith.constant 30 : index
    %793 = memref.load %arg2[%c30_381] : memref<40xf32, #tpu.memory_space<smem>>
    %794 = vector.broadcast %793 : f32 to vector<1x128xf32>
    %795 = arith.addf %792, %794 : vector<1x128xf32>
    %cst_382 = arith.constant 0.000000e+00 : f32
    %796 = vector.broadcast %cst_382 : f32 to vector<1x128xf32>
    %797 = arith.maximumf %795, %796 : vector<1x128xf32>
    %c6_383 = arith.constant 6 : index
    %c0_384 = arith.constant 0 : index
    %c0_385 = arith.constant 0 : index
    %c0_386 = arith.constant 0 : index
    %798 = vector.load %arg4[%c6_383, %c0_384, %c0_385, %c0_386] : memref<8x5x1x128xf32, #tpu.memory_space<vmem>>, vector<1x1x1x128xf32>
    %799 = vector.shape_cast %798 : vector<1x1x1x128xf32> to vector<1x128xf32>
    %800 = vector.shape_cast %797 : vector<1x128xf32> to vector<1x1x1x128xf32>
    tpu.vector_store %arg4[%c6_383, %c0_384, %c0_385, %c0_386], %800 {strides = array<i32>} : memref<8x5x1x128xf32, #tpu.memory_space<vmem>>, vector<1x1x1x128xf32>,
    %c61_387 = arith.constant 61 : index
    %801 = memref.load %arg1[%c61_387] : memref<80xf32, #tpu.memory_space<smem>>
    %802 = vector.broadcast %801 : f32 to vector<1x128xf32>
    %803 = arith.mulf %766, %802 : vector<1x128xf32>
    %c66_388 = arith.constant 66 : index
    %804 = memref.load %arg1[%c66_388] : memref<80xf32, #tpu.memory_space<smem>>
    %805 = vector.broadcast %804 : f32 to vector<1x128xf32>
    %806 = arith.mulf %785, %805 : vector<1x128xf32>
    %807 = arith.addf %803, %806 : vector<1x128xf32>
    %c31_389 = arith.constant 31 : index
    %808 = memref.load %arg2[%c31_389] : memref<40xf32, #tpu.memory_space<smem>>
    %809 = vector.broadcast %808 : f32 to vector<1x128xf32>
    %810 = arith.addf %807, %809 : vector<1x128xf32>
    %cst_390 = arith.constant 0.000000e+00 : f32
    %811 = vector.broadcast %cst_390 : f32 to vector<1x128xf32>
    %812 = arith.maximumf %810, %811 : vector<1x128xf32>
    %c6_391 = arith.constant 6 : index
    %c1_392 = arith.constant 1 : index
    %c0_393 = arith.constant 0 : index
    %c0_394 = arith.constant 0 : index
    %813 = vector.load %arg4[%c6_391, %c1_392, %c0_393, %c0_394] : memref<8x5x1x128xf32, #tpu.memory_space<vmem>>, vector<1x1x1x128xf32>
    %814 = vector.shape_cast %813 : vector<1x1x1x128xf32> to vector<1x128xf32>
    %815 = vector.shape_cast %812 : vector<1x128xf32> to vector<1x1x1x128xf32>
    tpu.vector_store %arg4[%c6_391, %c1_392, %c0_393, %c0_394], %815 {strides = array<i32>} : memref<8x5x1x128xf32, #tpu.memory_space<vmem>>, vector<1x1x1x128xf32>,
    %c62_395 = arith.constant 62 : index
    %816 = memref.load %arg1[%c62_395] : memref<80xf32, #tpu.memory_space<smem>>
    %817 = vector.broadcast %816 : f32 to vector<1x128xf32>
    %818 = arith.mulf %766, %817 : vector<1x128xf32>
    %c67_396 = arith.constant 67 : index
    %819 = memref.load %arg1[%c67_396] : memref<80xf32, #tpu.memory_space<smem>>
    %820 = vector.broadcast %819 : f32 to vector<1x128xf32>
    %821 = arith.mulf %785, %820 : vector<1x128xf32>
    %822 = arith.addf %818, %821 : vector<1x128xf32>
    %c32_397 = arith.constant 32 : index
    %823 = memref.load %arg2[%c32_397] : memref<40xf32, #tpu.memory_space<smem>>
    %824 = vector.broadcast %823 : f32 to vector<1x128xf32>
    %825 = arith.addf %822, %824 : vector<1x128xf32>
    %cst_398 = arith.constant 0.000000e+00 : f32
    %826 = vector.broadcast %cst_398 : f32 to vector<1x128xf32>
    %827 = arith.maximumf %825, %826 : vector<1x128xf32>
    %c6_399 = arith.constant 6 : index
    %c2_400 = arith.constant 2 : index
    %c0_401 = arith.constant 0 : index
    %c0_402 = arith.constant 0 : index
    %828 = vector.load %arg4[%c6_399, %c2_400, %c0_401, %c0_402] : memref<8x5x1x128xf32, #tpu.memory_space<vmem>>, vector<1x1x1x128xf32>
    %829 = vector.shape_cast %828 : vector<1x1x1x128xf32> to vector<1x128xf32>
    %830 = vector.shape_cast %827 : vector<1x128xf32> to vector<1x1x1x128xf32>
    tpu.vector_store %arg4[%c6_399, %c2_400, %c0_401, %c0_402], %830 {strides = array<i32>} : memref<8x5x1x128xf32, #tpu.memory_space<vmem>>, vector<1x1x1x128xf32>,
    %c63_403 = arith.constant 63 : index
    %831 = memref.load %arg1[%c63_403] : memref<80xf32, #tpu.memory_space<smem>>
    %832 = vector.broadcast %831 : f32 to vector<1x128xf32>
    %833 = arith.mulf %766, %832 : vector<1x128xf32>
    %c68_404 = arith.constant 68 : index
    %834 = memref.load %arg1[%c68_404] : memref<80xf32, #tpu.memory_space<smem>>
    %835 = vector.broadcast %834 : f32 to vector<1x128xf32>
    %836 = arith.mulf %785, %835 : vector<1x128xf32>
    %837 = arith.addf %833, %836 : vector<1x128xf32>
    %c33_405 = arith.constant 33 : index
    %838 = memref.load %arg2[%c33_405] : memref<40xf32, #tpu.memory_space<smem>>
    %839 = vector.broadcast %838 : f32 to vector<1x128xf32>
    %840 = arith.addf %837, %839 : vector<1x128xf32>
    %cst_406 = arith.constant 0.000000e+00 : f32
    %841 = vector.broadcast %cst_406 : f32 to vector<1x128xf32>
    %842 = arith.maximumf %840, %841 : vector<1x128xf32>
    %c6_407 = arith.constant 6 : index
    %c3_408 = arith.constant 3 : index
    %c0_409 = arith.constant 0 : index
    %c0_410 = arith.constant 0 : index
    %843 = vector.load %arg4[%c6_407, %c3_408, %c0_409, %c0_410] : memref<8x5x1x128xf32, #tpu.memory_space<vmem>>, vector<1x1x1x128xf32>
    %844 = vector.shape_cast %843 : vector<1x1x1x128xf32> to vector<1x128xf32>
    %845 = vector.shape_cast %842 : vector<1x128xf32> to vector<1x1x1x128xf32>
    tpu.vector_store %arg4[%c6_407, %c3_408, %c0_409, %c0_410], %845 {strides = array<i32>} : memref<8x5x1x128xf32, #tpu.memory_space<vmem>>, vector<1x1x1x128xf32>,
    %c64_411 = arith.constant 64 : index
    %846 = memref.load %arg1[%c64_411] : memref<80xf32, #tpu.memory_space<smem>>
    %847 = vector.broadcast %846 : f32 to vector<1x128xf32>
    %848 = arith.mulf %766, %847 : vector<1x128xf32>
    %c69_412 = arith.constant 69 : index
    %849 = memref.load %arg1[%c69_412] : memref<80xf32, #tpu.memory_space<smem>>
    %850 = vector.broadcast %849 : f32 to vector<1x128xf32>
    %851 = arith.mulf %785, %850 : vector<1x128xf32>
    %852 = arith.addf %848, %851 : vector<1x128xf32>
    %c34_413 = arith.constant 34 : index
    %853 = memref.load %arg2[%c34_413] : memref<40xf32, #tpu.memory_space<smem>>
    %854 = vector.broadcast %853 : f32 to vector<1x128xf32>
    %855 = arith.addf %852, %854 : vector<1x128xf32>
    %cst_414 = arith.constant 0.000000e+00 : f32
    %856 = vector.broadcast %cst_414 : f32 to vector<1x128xf32>
    %857 = arith.maximumf %855, %856 : vector<1x128xf32>
    %c6_415 = arith.constant 6 : index
    %c4_416 = arith.constant 4 : index
    %c0_417 = arith.constant 0 : index
    %c0_418 = arith.constant 0 : index
    %858 = vector.load %arg4[%c6_415, %c4_416, %c0_417, %c0_418] : memref<8x5x1x128xf32, #tpu.memory_space<vmem>>, vector<1x1x1x128xf32>
    %859 = vector.shape_cast %858 : vector<1x1x1x128xf32> to vector<1x128xf32>
    %860 = vector.shape_cast %857 : vector<1x128xf32> to vector<1x1x1x128xf32>
    tpu.vector_store %arg4[%c6_415, %c4_416, %c0_417, %c0_418], %860 {strides = array<i32>} : memref<8x5x1x128xf32, #tpu.memory_space<vmem>>, vector<1x1x1x128xf32>,
    %c7_419 = arith.constant 7 : index
    %c0_420 = arith.constant 0 : index
    %c0_421 = arith.constant 0 : index
    %c0_422 = arith.constant 0 : index
    %861 = vector.load %arg3[%c7_419, %c0_420, %c0_421, %c0_422] : memref<8x5x1x128xf32, #tpu.memory_space<vmem>>, vector<1x1x1x128xf32>
    %862 = vector.shape_cast %861 : vector<1x1x1x128xf32> to vector<1x128xf32>
    %c7_423 = arith.constant 7 : index
    %c1_424 = arith.constant 1 : index
    %c0_425 = arith.constant 0 : index
    %c0_426 = arith.constant 0 : index
    %863 = vector.load %arg3[%c7_423, %c1_424, %c0_425, %c0_426] : memref<8x5x1x128xf32, #tpu.memory_space<vmem>>, vector<1x1x1x128xf32>
    %864 = vector.shape_cast %863 : vector<1x1x1x128xf32> to vector<1x128xf32>
    %c7_427 = arith.constant 7 : index
    %c2_428 = arith.constant 2 : index
    %c0_429 = arith.constant 0 : index
    %c0_430 = arith.constant 0 : index
    %865 = vector.load %arg3[%c7_427, %c2_428, %c0_429, %c0_430] : memref<8x5x1x128xf32, #tpu.memory_space<vmem>>, vector<1x1x1x128xf32>
    %866 = vector.shape_cast %865 : vector<1x1x1x128xf32> to vector<1x128xf32>
    %c7_431 = arith.constant 7 : index
    %c3_432 = arith.constant 3 : index
    %c0_433 = arith.constant 0 : index
    %c0_434 = arith.constant 0 : index
    %867 = vector.load %arg3[%c7_431, %c3_432, %c0_433, %c0_434] : memref<8x5x1x128xf32, #tpu.memory_space<vmem>>, vector<1x1x1x128xf32>
    %868 = vector.shape_cast %867 : vector<1x1x1x128xf32> to vector<1x128xf32>
    %c7_435 = arith.constant 7 : index
    %c4_436 = arith.constant 4 : index
    %c0_437 = arith.constant 0 : index
    %c0_438 = arith.constant 0 : index
    %869 = vector.load %arg3[%c7_435, %c4_436, %c0_437, %c0_438] : memref<8x5x1x128xf32, #tpu.memory_space<vmem>>, vector<1x1x1x128xf32>
    %870 = vector.shape_cast %869 : vector<1x1x1x128xf32> to vector<1x128xf32>
    %c70 = arith.constant 70 : index
    %871 = memref.load %arg1[%c70] : memref<80xf32, #tpu.memory_space<smem>>
    %872 = vector.broadcast %871 : f32 to vector<1x128xf32>
    %873 = arith.mulf %862, %872 : vector<1x128xf32>
    %c71 = arith.constant 71 : index
    %874 = memref.load %arg1[%c71] : memref<80xf32, #tpu.memory_space<smem>>
    %875 = vector.broadcast %874 : f32 to vector<1x128xf32>
    %876 = arith.mulf %864, %875 : vector<1x128xf32>
    %877 = arith.addf %873, %876 : vector<1x128xf32>
    %c72 = arith.constant 72 : index
    %878 = memref.load %arg1[%c72] : memref<80xf32, #tpu.memory_space<smem>>
    %879 = vector.broadcast %878 : f32 to vector<1x128xf32>
    %880 = arith.mulf %866, %879 : vector<1x128xf32>
    %881 = arith.addf %877, %880 : vector<1x128xf32>
    %c73 = arith.constant 73 : index
    %882 = memref.load %arg1[%c73] : memref<80xf32, #tpu.memory_space<smem>>
    %883 = vector.broadcast %882 : f32 to vector<1x128xf32>
    %884 = arith.mulf %868, %883 : vector<1x128xf32>
    %885 = arith.addf %881, %884 : vector<1x128xf32>
    %c74 = arith.constant 74 : index
    %886 = memref.load %arg1[%c74] : memref<80xf32, #tpu.memory_space<smem>>
    %887 = vector.broadcast %886 : f32 to vector<1x128xf32>
    %888 = arith.mulf %870, %887 : vector<1x128xf32>
    %889 = arith.addf %885, %888 : vector<1x128xf32>
    %c75 = arith.constant 75 : index
    %890 = memref.load %arg1[%c75] : memref<80xf32, #tpu.memory_space<smem>>
    %891 = vector.broadcast %890 : f32 to vector<1x128xf32>
    %892 = arith.mulf %862, %891 : vector<1x128xf32>
    %c76 = arith.constant 76 : index
    %893 = memref.load %arg1[%c76] : memref<80xf32, #tpu.memory_space<smem>>
    %894 = vector.broadcast %893 : f32 to vector<1x128xf32>
    %895 = arith.mulf %864, %894 : vector<1x128xf32>
    %896 = arith.addf %892, %895 : vector<1x128xf32>
    %c77 = arith.constant 77 : index
    %897 = memref.load %arg1[%c77] : memref<80xf32, #tpu.memory_space<smem>>
    %898 = vector.broadcast %897 : f32 to vector<1x128xf32>
    %899 = arith.mulf %866, %898 : vector<1x128xf32>
    %900 = arith.addf %896, %899 : vector<1x128xf32>
    %c78 = arith.constant 78 : index
    %901 = memref.load %arg1[%c78] : memref<80xf32, #tpu.memory_space<smem>>
    %902 = vector.broadcast %901 : f32 to vector<1x128xf32>
    %903 = arith.mulf %868, %902 : vector<1x128xf32>
    %904 = arith.addf %900, %903 : vector<1x128xf32>
    %c79 = arith.constant 79 : index
    %905 = memref.load %arg1[%c79] : memref<80xf32, #tpu.memory_space<smem>>
    %906 = vector.broadcast %905 : f32 to vector<1x128xf32>
    %907 = arith.mulf %870, %906 : vector<1x128xf32>
    %908 = arith.addf %904, %907 : vector<1x128xf32>
    %c70_439 = arith.constant 70 : index
    %909 = memref.load %arg1[%c70_439] : memref<80xf32, #tpu.memory_space<smem>>
    %910 = vector.broadcast %909 : f32 to vector<1x128xf32>
    %911 = arith.mulf %889, %910 : vector<1x128xf32>
    %c75_440 = arith.constant 75 : index
    %912 = memref.load %arg1[%c75_440] : memref<80xf32, #tpu.memory_space<smem>>
    %913 = vector.broadcast %912 : f32 to vector<1x128xf32>
    %914 = arith.mulf %908, %913 : vector<1x128xf32>
    %915 = arith.addf %911, %914 : vector<1x128xf32>
    %c35_441 = arith.constant 35 : index
    %916 = memref.load %arg2[%c35_441] : memref<40xf32, #tpu.memory_space<smem>>
    %917 = vector.broadcast %916 : f32 to vector<1x128xf32>
    %918 = arith.addf %915, %917 : vector<1x128xf32>
    %cst_442 = arith.constant 0.000000e+00 : f32
    %919 = vector.broadcast %cst_442 : f32 to vector<1x128xf32>
    %920 = arith.maximumf %918, %919 : vector<1x128xf32>
    %c7_443 = arith.constant 7 : index
    %c0_444 = arith.constant 0 : index
    %c0_445 = arith.constant 0 : index
    %c0_446 = arith.constant 0 : index
    %921 = vector.load %arg4[%c7_443, %c0_444, %c0_445, %c0_446] : memref<8x5x1x128xf32, #tpu.memory_space<vmem>>, vector<1x1x1x128xf32>
    %922 = vector.shape_cast %921 : vector<1x1x1x128xf32> to vector<1x128xf32>
    %923 = vector.shape_cast %920 : vector<1x128xf32> to vector<1x1x1x128xf32>
    tpu.vector_store %arg4[%c7_443, %c0_444, %c0_445, %c0_446], %923 {strides = array<i32>} : memref<8x5x1x128xf32, #tpu.memory_space<vmem>>, vector<1x1x1x128xf32>,
    %c71_447 = arith.constant 71 : index
    %924 = memref.load %arg1[%c71_447] : memref<80xf32, #tpu.memory_space<smem>>
    %925 = vector.broadcast %924 : f32 to vector<1x128xf32>
    %926 = arith.mulf %889, %925 : vector<1x128xf32>
    %c76_448 = arith.constant 76 : index
    %927 = memref.load %arg1[%c76_448] : memref<80xf32, #tpu.memory_space<smem>>
    %928 = vector.broadcast %927 : f32 to vector<1x128xf32>
    %929 = arith.mulf %908, %928 : vector<1x128xf32>
    %930 = arith.addf %926, %929 : vector<1x128xf32>
    %c36_449 = arith.constant 36 : index
    %931 = memref.load %arg2[%c36_449] : memref<40xf32, #tpu.memory_space<smem>>
    %932 = vector.broadcast %931 : f32 to vector<1x128xf32>
    %933 = arith.addf %930, %932 : vector<1x128xf32>
    %cst_450 = arith.constant 0.000000e+00 : f32
    %934 = vector.broadcast %cst_450 : f32 to vector<1x128xf32>
    %935 = arith.maximumf %933, %934 : vector<1x128xf32>
    %c7_451 = arith.constant 7 : index
    %c1_452 = arith.constant 1 : index
    %c0_453 = arith.constant 0 : index
    %c0_454 = arith.constant 0 : index
    %936 = vector.load %arg4[%c7_451, %c1_452, %c0_453, %c0_454] : memref<8x5x1x128xf32, #tpu.memory_space<vmem>>, vector<1x1x1x128xf32>
    %937 = vector.shape_cast %936 : vector<1x1x1x128xf32> to vector<1x128xf32>
    %938 = vector.shape_cast %935 : vector<1x128xf32> to vector<1x1x1x128xf32>
    tpu.vector_store %arg4[%c7_451, %c1_452, %c0_453, %c0_454], %938 {strides = array<i32>} : memref<8x5x1x128xf32, #tpu.memory_space<vmem>>, vector<1x1x1x128xf32>,
    %c72_455 = arith.constant 72 : index
    %939 = memref.load %arg1[%c72_455] : memref<80xf32, #tpu.memory_space<smem>>
    %940 = vector.broadcast %939 : f32 to vector<1x128xf32>
    %941 = arith.mulf %889, %940 : vector<1x128xf32>
    %c77_456 = arith.constant 77 : index
    %942 = memref.load %arg1[%c77_456] : memref<80xf32, #tpu.memory_space<smem>>
    %943 = vector.broadcast %942 : f32 to vector<1x128xf32>
    %944 = arith.mulf %908, %943 : vector<1x128xf32>
    %945 = arith.addf %941, %944 : vector<1x128xf32>
    %c37_457 = arith.constant 37 : index
    %946 = memref.load %arg2[%c37_457] : memref<40xf32, #tpu.memory_space<smem>>
    %947 = vector.broadcast %946 : f32 to vector<1x128xf32>
    %948 = arith.addf %945, %947 : vector<1x128xf32>
    %cst_458 = arith.constant 0.000000e+00 : f32
    %949 = vector.broadcast %cst_458 : f32 to vector<1x128xf32>
    %950 = arith.maximumf %948, %949 : vector<1x128xf32>
    %c7_459 = arith.constant 7 : index
    %c2_460 = arith.constant 2 : index
    %c0_461 = arith.constant 0 : index
    %c0_462 = arith.constant 0 : index
    %951 = vector.load %arg4[%c7_459, %c2_460, %c0_461, %c0_462] : memref<8x5x1x128xf32, #tpu.memory_space<vmem>>, vector<1x1x1x128xf32>
    %952 = vector.shape_cast %951 : vector<1x1x1x128xf32> to vector<1x128xf32>
    %953 = vector.shape_cast %950 : vector<1x128xf32> to vector<1x1x1x128xf32>
    tpu.vector_store %arg4[%c7_459, %c2_460, %c0_461, %c0_462], %953 {strides = array<i32>} : memref<8x5x1x128xf32, #tpu.memory_space<vmem>>, vector<1x1x1x128xf32>,
    %c73_463 = arith.constant 73 : index
    %954 = memref.load %arg1[%c73_463] : memref<80xf32, #tpu.memory_space<smem>>
    %955 = vector.broadcast %954 : f32 to vector<1x128xf32>
    %956 = arith.mulf %889, %955 : vector<1x128xf32>
    %c78_464 = arith.constant 78 : index
    %957 = memref.load %arg1[%c78_464] : memref<80xf32, #tpu.memory_space<smem>>
    %958 = vector.broadcast %957 : f32 to vector<1x128xf32>
    %959 = arith.mulf %908, %958 : vector<1x128xf32>
    %960 = arith.addf %956, %959 : vector<1x128xf32>
    %c38_465 = arith.constant 38 : index
    %961 = memref.load %arg2[%c38_465] : memref<40xf32, #tpu.memory_space<smem>>
    %962 = vector.broadcast %961 : f32 to vector<1x128xf32>
    %963 = arith.addf %960, %962 : vector<1x128xf32>
    %cst_466 = arith.constant 0.000000e+00 : f32
    %964 = vector.broadcast %cst_466 : f32 to vector<1x128xf32>
    %965 = arith.maximumf %963, %964 : vector<1x128xf32>
    %c7_467 = arith.constant 7 : index
    %c3_468 = arith.constant 3 : index
    %c0_469 = arith.constant 0 : index
    %c0_470 = arith.constant 0 : index
    %966 = vector.load %arg4[%c7_467, %c3_468, %c0_469, %c0_470] : memref<8x5x1x128xf32, #tpu.memory_space<vmem>>, vector<1x1x1x128xf32>
    %967 = vector.shape_cast %966 : vector<1x1x1x128xf32> to vector<1x128xf32>
    %968 = vector.shape_cast %965 : vector<1x128xf32> to vector<1x1x1x128xf32>
    tpu.vector_store %arg4[%c7_467, %c3_468, %c0_469, %c0_470], %968 {strides = array<i32>} : memref<8x5x1x128xf32, #tpu.memory_space<vmem>>, vector<1x1x1x128xf32>,
    %c74_471 = arith.constant 74 : index
    %969 = memref.load %arg1[%c74_471] : memref<80xf32, #tpu.memory_space<smem>>
    %970 = vector.broadcast %969 : f32 to vector<1x128xf32>
    %971 = arith.mulf %889, %970 : vector<1x128xf32>
    %c79_472 = arith.constant 79 : index
    %972 = memref.load %arg1[%c79_472] : memref<80xf32, #tpu.memory_space<smem>>
    %973 = vector.broadcast %972 : f32 to vector<1x128xf32>
    %974 = arith.mulf %908, %973 : vector<1x128xf32>
    %975 = arith.addf %971, %974 : vector<1x128xf32>
    %c39_473 = arith.constant 39 : index
    %976 = memref.load %arg2[%c39_473] : memref<40xf32, #tpu.memory_space<smem>>
    %977 = vector.broadcast %976 : f32 to vector<1x128xf32>
    %978 = arith.addf %975, %977 : vector<1x128xf32>
    %cst_474 = arith.constant 0.000000e+00 : f32
    %979 = vector.broadcast %cst_474 : f32 to vector<1x128xf32>
    %980 = arith.maximumf %978, %979 : vector<1x128xf32>
    %c7_475 = arith.constant 7 : index
    %c4_476 = arith.constant 4 : index
    %c0_477 = arith.constant 0 : index
    %c0_478 = arith.constant 0 : index
    %981 = vector.load %arg4[%c7_475, %c4_476, %c0_477, %c0_478] : memref<8x5x1x128xf32, #tpu.memory_space<vmem>>, vector<1x1x1x128xf32>
    %982 = vector.shape_cast %981 : vector<1x1x1x128xf32> to vector<1x128xf32>
    %983 = vector.shape_cast %980 : vector<1x128xf32> to vector<1x1x1x128xf32>
    tpu.vector_store %arg4[%c7_475, %c4_476, %c0_477, %c0_478], %983 {strides = array<i32>} : memref<8x5x1x128xf32, #tpu.memory_space<vmem>>, vector<1x1x1x128xf32>,
    return
  }
  func.func @transform_0(%arg0: i32) -> i32 {
    %c0_i32 = arith.constant 0 : i32
    %c0_i32_0 = arith.constant 0 : i32
    return %c0_i32 : i32
  }
  func.func @transform_1(%arg0: i32) -> i32 {
    %c0_i32 = arith.constant 0 : i32
    %c0_i32_0 = arith.constant 0 : i32
    return %c0_i32 : i32
  }
  func.func @transform_2(%arg0: i32) -> (i32, i32, i32, i32) {
    %c0_i32 = arith.constant 0 : i32
    %c0_i32_0 = arith.constant 0 : i32
    %c0_i32_1 = arith.constant 0 : i32
    %c0_i32_2 = arith.constant 0 : i32
    return %c0_i32, %c0_i32_0, %arg0, %c0_i32_1 : i32, i32, i32, i32
  }
  func.func @transform_3(%arg0: i32) -> (i32, i32, i32, i32) {
    %c0_i32 = arith.constant 0 : i32
    %c0_i32_0 = arith.constant 0 : i32
    %c0_i32_1 = arith.constant 0 : i32
    %c0_i32_2 = arith.constant 0 : i32
    return %c0_i32, %c0_i32_0, %arg0, %c0_i32_1 : i32, i32, i32, i32
  }
}

</mosaic_0001>

<llo_original>
// kernel: tpu_custom_call.1
$region0: #{tpu_custom_call.1}
  #allocation0 [shape = 'u32[]', space=smem, size = 0x4, offset = 0x4, fixed_abs, tag = 'smem constant byte address 0x4 - core index']
  #allocation1 [shape = 'u32[72,128]{1,0:T(1,128)}', space=vmem, size = 0x9000, scoped, tag = 'internal scratch']
  %s0 = inlined_call_operand.hbm [shape: f32[80], index: 0, kind: input, shape index: {}]
  %s1 = inlined_call_operand.hbm [shape: f32[40], index: 1, kind: input, shape index: {}]
  %s2 = inlined_call_operand.hbm [shape: f32[8,5,1,128], index: 2, kind: input, shape index: {}]
  %s3 = inlined_call_operand.hbm [shape: f32[8,5,1,128], index: 3, kind: output, shape index: {}]
  %s4 = sld [smem:[#allocation0]]
  $region34: #{tpu_custom_call.1} parent=0
    _
  %s6 = ssub.s32 1, %s4
  %s7 = scalar_select 0, %s6, %s4
  $region1: #{tpu_custom_call.1} parent=0
    #allocation2 [shape = 'u8[512]{0}', space=smem, size = 0x200, scoped, tag = 'input window, operand 0, single buffered']
    #allocation3 [shape = 's32[1]{0}', space=sflag, size = 0x4, scoped, tag = 'scoped memory for tpu_custom_call.1']
    #allocation4 [shape = 's32[1]{0}', space=sflag, size = 0x4, scoped, tag = 'scoped memory for tpu_custom_call.1']
    #allocation5 [shape = 's32[1]{0}', space=sflag, size = 0x4, scoped, tag = 'scoped memory for tpu_custom_call.1']
    #allocation6 [shape = 'u8[512]{0}', space=smem, size = 0x200, scoped, tag = 'input window, operand 1, single buffered']
    #allocation7 [shape = 's32[1]{0}', space=sflag, size = 0x4, scoped, tag = 'scoped memory for tpu_custom_call.1']
    #allocation8 [shape = 'u8[20480]{0}', space=vmem, size = 0x5000, scoped, tag = 'input window, operand 2, single buffered']
    #allocation9 [shape = 'u8[20480]{0}', space=vmem, size = 0x5000, scoped, tag = 'output window, operand 0, single buffered']
    %8 = vsyncpa [#allocation5], 0
    %9 = vsyncpa [#allocation7], 0
    %10 = vsyncpa [#allocation3], 0
    %11 = vsyncpa [#allocation4], 0
    // Predicated region
    $region2: #{tpu_custom_call.1} parent=1 // pred_check
      _
    $region3: #{tpu_custom_call.1} parent=1 // pred_check_branch
      %13 = sbr.rel (0) target = $region5
    $region4: #{tpu_custom_call.1} parent=1 // pred_region
      %15 = vsyncadd [#allocation5], 0
      %s17 = sshll.u32 %s0, 4
      %s18 = int_to_ptr.hbm [resolvable:$true] %s17
      %20 = dma.hbm_to_smem %s18, 16, [#allocation2], [#allocation5]
    $region5: #{tpu_custom_call.1} parent=1 // pred_fallthru
      _
    // Predicated region
    $region6: #{tpu_custom_call.1} parent=1 // pred_check
      _
    $region7: #{tpu_custom_call.1} parent=1 // pred_check_branch
      %22 = sbr.rel (0) target = $region9
    $region8: #{tpu_custom_call.1} parent=1 // pred_region
      %24 = vsyncadd [#allocation7], 0
      %s26 = sshll.u32 %s1, 4
      %s27 = int_to_ptr.hbm [resolvable:$true] %s26
      %29 = dma.hbm_to_smem %s27, 16, [#allocation6], [#allocation7]
    $region9: #{tpu_custom_call.1} parent=1 // pred_fallthru
      _
    // Predicated region
    $region10: #{tpu_custom_call.1} parent=1 // pred_check
      _
    $region11: #{tpu_custom_call.1} parent=1 // pred_check_branch
      %31 = sbr.rel (0) target = $region13
    $region12: #{tpu_custom_call.1} parent=1 // pred_region
      %33 = vsyncadd [#allocation3], 0
      %s34 = sshll.u32 %s2, 4
      %s35 = int_to_ptr.hbm [resolvable:$true] %s34
      %s36 = sshll.u32 [#allocation8], 4
      %s37 = int_to_ptr.vmem [resolvable:$true] %s36
      %42 = dma.hbm_to_vmem [thread:$0]  %s35, 640, %s37, [#allocation3], 16, 16, 1
    $region13: #{tpu_custom_call.1} parent=1 // pred_fallthru
      _
    // Predicated region
    $region14: #{tpu_custom_call.1} parent=1 // pred_check
      _
    $region15: #{tpu_custom_call.1} parent=1 // pred_check_branch
      %44 = sbr.rel (0) target = $region17
    $region16: #{tpu_custom_call.1} parent=1 // pred_region
      %46 = dma.done [#allocation5], 16
    $region17: #{tpu_custom_call.1} parent=1 // pred_fallthru
      _
    // Predicated region
    $region18: #{tpu_custom_call.1} parent=1 // pred_check
      _
    $region19: #{tpu_custom_call.1} parent=1 // pred_check_branch
      %48 = sbr.rel (0) target = $region21
    $region20: #{tpu_custom_call.1} parent=1 // pred_region
      %50 = dma.done [#allocation7], 16
    $region21: #{tpu_custom_call.1} parent=1 // pred_fallthru
      _
    // Predicated region
    $region22: #{tpu_custom_call.1} parent=1 // pred_check
      _
    $region23: #{tpu_custom_call.1} parent=1 // pred_check_branch
      %52 = sbr.rel (0) target = $region25
    $region24: #{tpu_custom_call.1} parent=1 // pred_region
      %54 = dma.done [#allocation3], 640
    $region25: #{tpu_custom_call.1} parent=1 // pred_fallthru
      _
    %55 = sfence
    %v56 = vld [vmem:[#allocation8] sm:$0x1]
    %s57 = scalar_lea.vmem [#allocation8], 1
    %v58 = vld [vmem:[%s57] sm:$0x1]
    %s59 = scalar_lea.vmem [#allocation8], 2
    %v60 = vld [vmem:[%s59] sm:$0x1]
    %s61 = scalar_lea.vmem [#allocation8], 3
    %v62 = vld [vmem:[%s61] sm:$0x1]
    %s63 = scalar_lea.vmem [#allocation8], 4
    %v64 = vld [vmem:[%s63] sm:$0x1]
    %s65 = sld [smem:[#allocation2]]
    %v66 = vstv %s65
    %v67 = vmul.f32 %v56, %v66
    %s68 = sld [smem:[#allocation2 + $0x1]]
    %v69 = vstv %s68
    %v70 = vmul.f32 %v58, %v69
    %v71 = vadd.f32 %v67, %v70
    %s72 = sld [smem:[#allocation2 + $0x2]]
    %v73 = vstv %s72
    %v74 = vmul.f32 %v60, %v73
    %v75 = vadd.f32 %v71, %v74
    %s76 = sld [smem:[#allocation2 + $0x3]]
    %v77 = vstv %s76
    %v78 = vmul.f32 %v62, %v77
    %v79 = vadd.f32 %v75, %v78
    %s80 = sld [smem:[#allocation2 + $0x4]]
    %v81 = vstv %s80
    %v82 = vmul.f32 %v64, %v81
    %v83 = vadd.f32 %v79, %v82
    %s84 = sld [smem:[#allocation2 + $0x5]]
    %v85 = vstv %s84
    %v86 = vmul.f32 %v56, %v85
    %s87 = sld [smem:[#allocation2 + $0x6]]
    %v88 = vstv %s87
    %v89 = vmul.f32 %v58, %v88
    %v90 = vadd.f32 %v86, %v89
    %s91 = sld [smem:[#allocation2 + $0x7]]
    %v92 = vstv %s91
    %v93 = vmul.f32 %v60, %v92
    %v94 = vadd.f32 %v90, %v93
    %s95 = sld [smem:[#allocation2 + $0x8]]
    %v96 = vstv %s95
    %v97 = vmul.f32 %v62, %v96
    %v98 = vadd.f32 %v94, %v97
    %s99 = sld [smem:[#allocation2 + $0x9]]
    %v100 = vstv %s99
    %v101 = vmul.f32 %v64, %v100
    %v102 = vadd.f32 %v98, %v101
    %v103 = vmul.f32 %v83, %v66
    %v104 = vmul.f32 %v102, %v85
    %v105 = vadd.f32 %v103, %v104
    %s106 = sld [smem:[#allocation6]]
    %v107 = vstv %s106
    %v108 = vadd.f32 %v105, %v107
    %v109 = vmax.f32 %v108, 0.0
    %110 = vst [vmem:[#allocation9] sm:$0x1] %v109
    %s111 = sld [smem:[#allocation2 + $0x1]]
    %v112 = vstv %s111
    %v113 = vmul.f32 %v83, %v112
    %s114 = sld [smem:[#allocation2 + $0x6]]
    %v115 = vstv %s114
    %v116 = vmul.f32 %v102, %v115
    %v117 = vadd.f32 %v113, %v116
    %s118 = sld [smem:[#allocation6 + $0x1]]
    %v119 = vstv %s118
    %v120 = vadd.f32 %v117, %v119
    %v121 = vmax.f32 %v120, 0.0
    %s122 = scalar_lea.vmem [#allocation9], 1
    %123 = vst [vmem:[%s122] sm:$0x1] %v121
    %s124 = sld [smem:[#allocation2 + $0x2]]
    %v125 = vstv %s124
    %v126 = vmul.f32 %v83, %v125
    %s127 = sld [smem:[#allocation2 + $0x7]]
    %v128 = vstv %s127
    %v129 = vmul.f32 %v102, %v128
    %v130 = vadd.f32 %v126, %v129
    %s131 = sld [smem:[#allocation6 + $0x2]]
    %v132 = vstv %s131
    %v133 = vadd.f32 %v130, %v132
    %v134 = vmax.f32 %v133, 0.0
    %s135 = scalar_lea.vmem [#allocation9], 2
    %136 = vst [vmem:[%s135] sm:$0x1] %v134
    %s137 = sld [smem:[#allocation2 + $0x3]]
    %v138 = vstv %s137
    %v139 = vmul.f32 %v83, %v138
    %s140 = sld [smem:[#allocation2 + $0x8]]
    %v141 = vstv %s140
    %v142 = vmul.f32 %v102, %v141
    %v143 = vadd.f32 %v139, %v142
    %s144 = sld [smem:[#allocation6 + $0x3]]
    %v145 = vstv %s144
    %v146 = vadd.f32 %v143, %v145
    %v147 = vmax.f32 %v146, 0.0
    %s148 = scalar_lea.vmem [#allocation9], 3
    %149 = vst [vmem:[%s148] sm:$0x1] %v147
    %s150 = sld [smem:[#allocation2 + $0x4]]
    %v151 = vstv %s150
    %v152 = vmul.f32 %v83, %v151
    %s153 = sld [smem:[#allocation2 + $0x9]]
    %v154 = vstv %s153
    %v155 = vmul.f32 %v102, %v154
    %v156 = vadd.f32 %v152, %v155
    %s157 = sld [smem:[#allocation6 + $0x4]]
    %v158 = vstv %s157
    %v159 = vadd.f32 %v156, %v158
    %v160 = vmax.f32 %v159, 0.0
    %s161 = scalar_lea.vmem [#allocation9], 4
    %162 = vst [vmem:[%s161] sm:$0x1] %v160
    %s163 = scalar_lea.vmem [#allocation8], 5
    %v164 = vld [vmem:[%s163] sm:$0x1]
    %s165 = scalar_lea.vmem [#allocation8], 6
    %v166 = vld [vmem:[%s165] sm:$0x1]
    %s167 = scalar_lea.vmem [#allocation8], 7
    %v168 = vld [vmem:[%s167] sm:$0x1]
    %s169 = scalar_lea.vmem [#allocation8], 8
    %v170 = vld [vmem:[%s169] sm:$0x1]
    %s171 = scalar_lea.vmem [#allocation8], 9
    %v172 = vld [vmem:[%s171] sm:$0x1]
    %s173 = sld [smem:[#allocation2 + $0xa]]
    %v174 = vstv %s173
    %v175 = vmul.f32 %v164, %v174
    %s176 = sld [smem:[#allocation2 + $0xb]]
    %v177 = vstv %s176
    %v178 = vmul.f32 %v166, %v177
    %v179 = vadd.f32 %v175, %v178
    %s180 = sld [smem:[#allocation2 + $0xc]]
    %v181 = vstv %s180
    %v182 = vmul.f32 %v168, %v181
    %v183 = vadd.f32 %v179, %v182
    %s184 = sld [smem:[#allocation2 + $0xd]]
    %v185 = vstv %s184
    %v186 = vmul.f32 %v170, %v185
    %v187 = vadd.f32 %v183, %v186
    %s188 = sld [smem:[#allocation2 + $0xe]]
    %v189 = vstv %s188
    %v190 = vmul.f32 %v172, %v189
    %v191 = vadd.f32 %v187, %v190
    %s192 = sld [smem:[#allocation2 + $0xf]]
    %v193 = vstv %s192
    %v194 = vmul.f32 %v164, %v193
    %s195 = sld [smem:[#allocation2 + $0x10]]
    %v196 = vstv %s195
    %v197 = vmul.f32 %v166, %v196
    %v198 = vadd.f32 %v194, %v197
    %s199 = sld [smem:[#allocation2 + $0x11]]
    %v200 = vstv %s199
    %v201 = vmul.f32 %v168, %v200
    %v202 = vadd.f32 %v198, %v201
    %s203 = sld [smem:[#allocation2 + $0x12]]
    %v204 = vstv %s203
    %v205 = vmul.f32 %v170, %v204
    %v206 = vadd.f32 %v202, %v205
    %s207 = sld [smem:[#allocation2 + $0x13]]
    %v208 = vstv %s207
    %v209 = vmul.f32 %v172, %v208
    %v210 = vadd.f32 %v206, %v209
    %v211 = vmul.f32 %v191, %v174
    %v212 = vmul.f32 %v210, %v193
    %v213 = vadd.f32 %v211, %v212
    %s214 = sld [smem:[#allocation6 + $0x5]]
    %v215 = vstv %s214
    %v216 = vadd.f32 %v213, %v215
    %v217 = vmax.f32 %v216, 0.0
    %s218 = scalar_lea.vmem [#allocation9], 5
    %219 = vst [vmem:[%s218] sm:$0x1] %v217
    %s220 = sld [smem:[#allocation2 + $0xb]]
    %v221 = vstv %s220
    %v222 = vmul.f32 %v191, %v221
    %s223 = sld [smem:[#allocation2 + $0x10]]
    %v224 = vstv %s223
    %v225 = vmul.f32 %v210, %v224
    %v226 = vadd.f32 %v222, %v225
    %s227 = sld [smem:[#allocation6 + $0x6]]
    %v228 = vstv %s227
    %v229 = vadd.f32 %v226, %v228
    %v230 = vmax.f32 %v229, 0.0
    %s231 = scalar_lea.vmem [#allocation9], 6
    %232 = vst [vmem:[%s231] sm:$0x1] %v230
    %s233 = sld [smem:[#allocation2 + $0xc]]
    %v234 = vstv %s233
    %v235 = vmul.f32 %v191, %v234
    %s236 = sld [smem:[#allocation2 + $0x11]]
    %v237 = vstv %s236
    %v238 = vmul.f32 %v210, %v237
    %v239 = vadd.f32 %v235, %v238
    %s240 = sld [smem:[#allocation6 + $0x7]]
    %v241 = vstv %s240
    %v242 = vadd.f32 %v239, %v241
    %v243 = vmax.f32 %v242, 0.0
    %s244 = scalar_lea.vmem [#allocation9], 7
    %245 = vst [vmem:[%s244] sm:$0x1] %v243
    %s246 = sld [smem:[#allocation2 + $0xd]]
    %v247 = vstv %s246
    %v248 = vmul.f32 %v191, %v247
    %s249 = sld [smem:[#allocation2 + $0x12]]
    %v250 = vstv %s249
    %v251 = vmul.f32 %v210, %v250
    %v252 = vadd.f32 %v248, %v251
    %s253 = sld [smem:[#allocation6 + $0x8]]
    %v254 = vstv %s253
    %v255 = vadd.f32 %v252, %v254
    %v256 = vmax.f32 %v255, 0.0
    %s257 = scalar_lea.vmem [#allocation9], 8
    %258 = vst [vmem:[%s257] sm:$0x1] %v256
    %s259 = sld [smem:[#allocation2 + $0xe]]
    %v260 = vstv %s259
    %v261 = vmul.f32 %v191, %v260
    %s262 = sld [smem:[#allocation2 + $0x13]]
    %v263 = vstv %s262
    %v264 = vmul.f32 %v210, %v263
    %v265 = vadd.f32 %v261, %v264
    %s266 = sld [smem:[#allocation6 + $0x9]]
    %v267 = vstv %s266
    %v268 = vadd.f32 %v265, %v267
    %v269 = vmax.f32 %v268, 0.0
    %s270 = scalar_lea.vmem [#allocation9], 9
    %271 = vst [vmem:[%s270] sm:$0x1] %v269
    %s272 = scalar_lea.vmem [#allocation8], 10
    %v273 = vld [vmem:[%s272] sm:$0x1]
    %s274 = scalar_lea.vmem [#allocation8], 11
    %v275 = vld [vmem:[%s274] sm:$0x1]
    %s276 = scalar_lea.vmem [#allocation8], 12
    %v277 = vld [vmem:[%s276] sm:$0x1]
    %s278 = scalar_lea.vmem [#allocation8], 13
    %v279 = vld [vmem:[%s278] sm:$0x1]
    %s280 = scalar_lea.vmem [#allocation8], 14
    %v281 = vld [vmem:[%s280] sm:$0x1]
    %s282 = sld [smem:[#allocation2 + $0x14]]
    %v283 = vstv %s282
    %v284 = vmul.f32 %v273, %v283
    %s285 = sld [smem:[#allocation2 + $0x15]]
    %v286 = vstv %s285
    %v287 = vmul.f32 %v275, %v286
    %v288 = vadd.f32 %v284, %v287
    %s289 = sld [smem:[#allocation2 + $0x16]]
    %v290 = vstv %s289
    %v291 = vmul.f32 %v277, %v290
    %v292 = vadd.f32 %v288, %v291
    %s293 = sld [smem:[#allocation2 + $0x17]]
    %v294 = vstv %s293
    %v295 = vmul.f32 %v279, %v294
    %v296 = vadd.f32 %v292, %v295
    %s297 = sld [smem:[#allocation2 + $0x18]]
    %v298 = vstv %s297
    %v299 = vmul.f32 %v281, %v298
    %v300 = vadd.f32 %v296, %v299
    %s301 = sld [smem:[#allocation2 + $0x19]]
    %v302 = vstv %s301
    %v303 = vmul.f32 %v273, %v302
    %s304 = sld [smem:[#allocation2 + $0x1a]]
    %v305 = vstv %s304
    %v306 = vmul.f32 %v275, %v305
    %v307 = vadd.f32 %v303, %v306
    %s308 = sld [smem:[#allocation2 + $0x1b]]
    %v309 = vstv %s308
    %v310 = vmul.f32 %v277, %v309
    %v311 = vadd.f32 %v307, %v310
    %s312 = sld [smem:[#allocation2 + $0x1c]]
    %v313 = vstv %s312
    %v314 = vmul.f32 %v279, %v313
    %v315 = vadd.f32 %v311, %v314
    %s316 = sld [smem:[#allocation2 + $0x1d]]
    %v317 = vstv %s316
    %v318 = vmul.f32 %v281, %v317
    %v319 = vadd.f32 %v315, %v318
    %v320 = vmul.f32 %v300, %v283
    %v321 = vmul.f32 %v319, %v302
    %v322 = vadd.f32 %v320, %v321
    %s323 = sld [smem:[#allocation6 + $0xa]]
    %v324 = vstv %s323
    %v325 = vadd.f32 %v322, %v324
    %v326 = vmax.f32 %v325, 0.0
    %s327 = scalar_lea.vmem [#allocation9], 10
    %328 = vst [vmem:[%s327] sm:$0x1] %v326
    %s329 = sld [smem:[#allocation2 + $0x15]]
    %v330 = vstv %s329
    %v331 = vmul.f32 %v300, %v330
    %s332 = sld [smem:[#allocation2 + $0x1a]]
    %v333 = vstv %s332
    %v334 = vmul.f32 %v319, %v333
    %v335 = vadd.f32 %v331, %v334
    %s336 = sld [smem:[#allocation6 + $0xb]]
    %v337 = vstv %s336
    %v338 = vadd.f32 %v335, %v337
    %v339 = vmax.f32 %v338, 0.0
    %s340 = scalar_lea.vmem [#allocation9], 11
    %341 = vst [vmem:[%s340] sm:$0x1] %v339
    %s342 = sld [smem:[#allocation2 + $0x16]]
    %v343 = vstv %s342
    %v344 = vmul.f32 %v300, %v343
    %s345 = sld [smem:[#allocation2 + $0x1b]]
    %v346 = vstv %s345
    %v347 = vmul.f32 %v319, %v346
    %v348 = vadd.f32 %v344, %v347
    %s349 = sld [smem:[#allocation6 + $0xc]]
    %v350 = vstv %s349
    %v351 = vadd.f32 %v348, %v350
    %v352 = vmax.f32 %v351, 0.0
    %s353 = scalar_lea.vmem [#allocation9], 12
    %354 = vst [vmem:[%s353] sm:$0x1] %v352
    %s355 = sld [smem:[#allocation2 + $0x17]]
    %v356 = vstv %s355
    %v357 = vmul.f32 %v300, %v356
    %s358 = sld [smem:[#allocation2 + $0x1c]]
    %v359 = vstv %s358
    %v360 = vmul.f32 %v319, %v359
    %v361 = vadd.f32 %v357, %v360
    %s362 = sld [smem:[#allocation6 + $0xd]]
    %v363 = vstv %s362
    %v364 = vadd.f32 %v361, %v363
    %v365 = vmax.f32 %v364, 0.0
    %s366 = scalar_lea.vmem [#allocation9], 13
    %367 = vst [vmem:[%s366] sm:$0x1] %v365
    %s368 = sld [smem:[#allocation2 + $0x18]]
    %v369 = vstv %s368
    %v370 = vmul.f32 %v300, %v369
    %s371 = sld [smem:[#allocation2 + $0x1d]]
    %v372 = vstv %s371
    %v373 = vmul.f32 %v319, %v372
    %v374 = vadd.f32 %v370, %v373
    %s375 = sld [smem:[#allocation6 + $0xe]]
    %v376 = vstv %s375
    %v377 = vadd.f32 %v374, %v376
    %v378 = vmax.f32 %v377, 0.0
    %s379 = scalar_lea.vmem [#allocation9], 14
    %380 = vst [vmem:[%s379] sm:$0x1] %v378
    %s381 = scalar_lea.vmem [#allocation8], 15
    %v382 = vld [vmem:[%s381] sm:$0x1]
    %s383 = scalar_lea.vmem [#allocation8], 16
    %v384 = vld [vmem:[%s383] sm:$0x1]
    %s385 = scalar_lea.vmem [#allocation8], 17
    %v386 = vld [vmem:[%s385] sm:$0x1]
    %s387 = scalar_lea.vmem [#allocation8], 18
    %v388 = vld [vmem:[%s387] sm:$0x1]
    %s389 = scalar_lea.vmem [#allocation8], 19
    %v390 = vld [vmem:[%s389] sm:$0x1]
    %s391 = sld [smem:[#allocation2 + $0x1e]]
    %v392 = vstv %s391
    %v393 = vmul.f32 %v382, %v392
    %s394 = sld [smem:[#allocation2 + $0x1f]]
    %v395 = vstv %s394
    %v396 = vmul.f32 %v384, %v395
    %v397 = vadd.f32 %v393, %v396
    %s398 = sld [smem:[#allocation2 + $0x20]]
    %v399 = vstv %s398
    %v400 = vmul.f32 %v386, %v399
    %v401 = vadd.f32 %v397, %v400
    %s402 = sld [smem:[#allocation2 + $0x21]]
    %v403 = vstv %s402
    %v404 = vmul.f32 %v388, %v403
    %v405 = vadd.f32 %v401, %v404
    %s406 = sld [smem:[#allocation2 + $0x22]]
    %v407 = vstv %s406
    %v408 = vmul.f32 %v390, %v407
    %v409 = vadd.f32 %v405, %v408
    %s410 = sld [smem:[#allocation2 + $0x23]]
    %v411 = vstv %s410
    %v412 = vmul.f32 %v382, %v411
    %s413 = sld [smem:[#allocation2 + $0x24]]
    %v414 = vstv %s413
    %v415 = vmul.f32 %v384, %v414
    %v416 = vadd.f32 %v412, %v415
    %s417 = sld [smem:[#allocation2 + $0x25]]
    %v418 = vstv %s417
    %v419 = vmul.f32 %v386, %v418
    %v420 = vadd.f32 %v416, %v419
    %s421 = sld [smem:[#allocation2 + $0x26]]
    %v422 = vstv %s421
    %v423 = vmul.f32 %v388, %v422
    %v424 = vadd.f32 %v420, %v423
    %s425 = sld [smem:[#allocation2 + $0x27]]
    %v426 = vstv %s425
    %v427 = vmul.f32 %v390, %v426
    %v428 = vadd.f32 %v424, %v427
    %v429 = vmul.f32 %v409, %v392
    %v430 = vmul.f32 %v428, %v411
    %v431 = vadd.f32 %v429, %v430
    %s432 = sld [smem:[#allocation6 + $0xf]]
    %v433 = vstv %s432
    %v434 = vadd.f32 %v431, %v433
    %v435 = vmax.f32 %v434, 0.0
    %s436 = scalar_lea.vmem [#allocation9], 15
    %437 = vst [vmem:[%s436] sm:$0x1] %v435
    %s438 = sld [smem:[#allocation2 + $0x1f]]
    %v439 = vstv %s438
    %v440 = vmul.f32 %v409, %v439
    %s441 = sld [smem:[#allocation2 + $0x24]]
    %v442 = vstv %s441
    %v443 = vmul.f32 %v428, %v442
    %v444 = vadd.f32 %v440, %v443
    %s445 = sld [smem:[#allocation6 + $0x10]]
    %v446 = vstv %s445
    %v447 = vadd.f32 %v444, %v446
    %v448 = vmax.f32 %v447, 0.0
    %s449 = scalar_lea.vmem [#allocation9], 16
    %450 = vst [vmem:[%s449] sm:$0x1] %v448
    %s451 = sld [smem:[#allocation2 + $0x20]]
    %v452 = vstv %s451
    %v453 = vmul.f32 %v409, %v452
    %s454 = sld [smem:[#allocation2 + $0x25]]
    %v455 = vstv %s454
    %v456 = vmul.f32 %v428, %v455
    %v457 = vadd.f32 %v453, %v456
    %s458 = sld [smem:[#allocation6 + $0x11]]
    %v459 = vstv %s458
    %v460 = vadd.f32 %v457, %v459
    %v461 = vmax.f32 %v460, 0.0
    %s462 = scalar_lea.vmem [#allocation9], 17
    %463 = vst [vmem:[%s462] sm:$0x1] %v461
    %s464 = sld [smem:[#allocation2 + $0x21]]
    %v465 = vstv %s464
    %v466 = vmul.f32 %v409, %v465
    %s467 = sld [smem:[#allocation2 + $0x26]]
    %v468 = vstv %s467
    %v469 = vmul.f32 %v428, %v468
    %v470 = vadd.f32 %v466, %v469
    %s471 = sld [smem:[#allocation6 + $0x12]]
    %v472 = vstv %s471
    %v473 = vadd.f32 %v470, %v472
    %v474 = vmax.f32 %v473, 0.0
    %s475 = scalar_lea.vmem [#allocation9], 18
    %476 = vst [vmem:[%s475] sm:$0x1] %v474
    %s477 = sld [smem:[#allocation2 + $0x22]]
    %v478 = vstv %s477
    %v479 = vmul.f32 %v409, %v478
    %s480 = sld [smem:[#allocation2 + $0x27]]
    %v481 = vstv %s480
    %v482 = vmul.f32 %v428, %v481
    %v483 = vadd.f32 %v479, %v482
    %s484 = sld [smem:[#allocation6 + $0x13]]
    %v485 = vstv %s484
    %v486 = vadd.f32 %v483, %v485
    %v487 = vmax.f32 %v486, 0.0
    %s488 = scalar_lea.vmem [#allocation9], 19
    %489 = vst [vmem:[%s488] sm:$0x1] %v487
    %s490 = scalar_lea.vmem [#allocation8], 20
    %v491 = vld [vmem:[%s490] sm:$0x1]
    %s492 = scalar_lea.vmem [#allocation8], 21
    %v493 = vld [vmem:[%s492] sm:$0x1]
    %s494 = scalar_lea.vmem [#allocation8], 22
    %v495 = vld [vmem:[%s494] sm:$0x1]
    %s496 = scalar_lea.vmem [#allocation8], 23
    %v497 = vld [vmem:[%s496] sm:$0x1]
    %s498 = scalar_lea.vmem [#allocation8], 24
    %v499 = vld [vmem:[%s498] sm:$0x1]
    %s500 = sld [smem:[#allocation2 + $0x28]]
    %v501 = vstv %s500
    %v502 = vmul.f32 %v491, %v501
    %s503 = sld [smem:[#allocation2 + $0x29]]
    %v504 = vstv %s503
    %v505 = vmul.f32 %v493, %v504
    %v506 = vadd.f32 %v502, %v505
    %s507 = sld [smem:[#allocation2 + $0x2a]]
    %v508 = vstv %s507
    %v509 = vmul.f32 %v495, %v508
    %v510 = vadd.f32 %v506, %v509
    %s511 = sld [smem:[#allocation2 + $0x2b]]
    %v512 = vstv %s511
    %v513 = vmul.f32 %v497, %v512
    %v514 = vadd.f32 %v510, %v513
    %s515 = sld [smem:[#allocation2 + $0x2c]]
    %v516 = vstv %s515
    %v517 = vmul.f32 %v499, %v516
    %v518 = vadd.f32 %v514, %v517
    %s519 = sld [smem:[#allocation2 + $0x2d]]
    %v520 = vstv %s519
    %v521 = vmul.f32 %v491, %v520
    %s522 = sld [smem:[#allocation2 + $0x2e]]
    %v523 = vstv %s522
    %v524 = vmul.f32 %v493, %v523
    %v525 = vadd.f32 %v521, %v524
    %s526 = sld [smem:[#allocation2 + $0x2f]]
    %v527 = vstv %s526
    %v528 = vmul.f32 %v495, %v527
    %v529 = vadd.f32 %v525, %v528
    %s530 = sld [smem:[#allocation2 + $0x30]]
    %v531 = vstv %s530
    %v532 = vmul.f32 %v497, %v531
    %v533 = vadd.f32 %v529, %v532
    %s534 = sld [smem:[#allocation2 + $0x31]]
    %v535 = vstv %s534
    %v536 = vmul.f32 %v499, %v535
    %v537 = vadd.f32 %v533, %v536
    %v538 = vmul.f32 %v518, %v501
    %v539 = vmul.f32 %v537, %v520
    %v540 = vadd.f32 %v538, %v539
    %s541 = sld [smem:[#allocation6 + $0x14]]
    %v542 = vstv %s541
    %v543 = vadd.f32 %v540, %v542
    %v544 = vmax.f32 %v543, 0.0
    %s545 = scalar_lea.vmem [#allocation9], 20
    %546 = vst [vmem:[%s545] sm:$0x1] %v544
    %s547 = sld [smem:[#allocation2 + $0x29]]
    %v548 = vstv %s547
    %v549 = vmul.f32 %v518, %v548
    %s550 = sld [smem:[#allocation2 + $0x2e]]
    %v551 = vstv %s550
    %v552 = vmul.f32 %v537, %v551
    %v553 = vadd.f32 %v549, %v552
    %s554 = sld [smem:[#allocation6 + $0x15]]
    %v555 = vstv %s554
    %v556 = vadd.f32 %v553, %v555
    %v557 = vmax.f32 %v556, 0.0
    %s558 = scalar_lea.vmem [#allocation9], 21
    %559 = vst [vmem:[%s558] sm:$0x1] %v557
    %s560 = sld [smem:[#allocation2 + $0x2a]]
    %v561 = vstv %s560
    %v562 = vmul.f32 %v518, %v561
    %s563 = sld [smem:[#allocation2 + $0x2f]]
    %v564 = vstv %s563
    %v565 = vmul.f32 %v537, %v564
    %v566 = vadd.f32 %v562, %v565
    %s567 = sld [smem:[#allocation6 + $0x16]]
    %v568 = vstv %s567
    %v569 = vadd.f32 %v566, %v568
    %v570 = vmax.f32 %v569, 0.0
    %s571 = scalar_lea.vmem [#allocation9], 22
    %572 = vst [vmem:[%s571] sm:$0x1] %v570
    %s573 = sld [smem:[#allocation2 + $0x2b]]
    %v574 = vstv %s573
    %v575 = vmul.f32 %v518, %v574
    %s576 = sld [smem:[#allocation2 + $0x30]]
    %v577 = vstv %s576
    %v578 = vmul.f32 %v537, %v577
    %v579 = vadd.f32 %v575, %v578
    %s580 = sld [smem:[#allocation6 + $0x17]]
    %v581 = vstv %s580
    %v582 = vadd.f32 %v579, %v581
    %v583 = vmax.f32 %v582, 0.0
    %s584 = scalar_lea.vmem [#allocation9], 23
    %585 = vst [vmem:[%s584] sm:$0x1] %v583
    %s586 = sld [smem:[#allocation2 + $0x2c]]
    %v587 = vstv %s586
    %v588 = vmul.f32 %v518, %v587
    %s589 = sld [smem:[#allocation2 + $0x31]]
    %v590 = vstv %s589
    %v591 = vmul.f32 %v537, %v590
    %v592 = vadd.f32 %v588, %v591
    %s593 = sld [smem:[#allocation6 + $0x18]]
    %v594 = vstv %s593
    %v595 = vadd.f32 %v592, %v594
    %v596 = vmax.f32 %v595, 0.0
    %s597 = scalar_lea.vmem [#allocation9], 24
    %598 = vst [vmem:[%s597] sm:$0x1] %v596
    %s599 = scalar_lea.vmem [#allocation8], 25
    %v600 = vld [vmem:[%s599] sm:$0x1]
    %s601 = scalar_lea.vmem [#allocation8], 26
    %v602 = vld [vmem:[%s601] sm:$0x1]
    %s603 = scalar_lea.vmem [#allocation8], 27
    %v604 = vld [vmem:[%s603] sm:$0x1]
    %s605 = scalar_lea.vmem [#allocation8], 28
    %v606 = vld [vmem:[%s605] sm:$0x1]
    %s607 = scalar_lea.vmem [#allocation8], 29
    %v608 = vld [vmem:[%s607] sm:$0x1]
    %s609 = sld [smem:[#allocation2 + $0x32]]
    %v610 = vstv %s609
    %v611 = vmul.f32 %v600, %v610
    %s612 = sld [smem:[#allocation2 + $0x33]]
    %v613 = vstv %s612
    %v614 = vmul.f32 %v602, %v613
    %v615 = vadd.f32 %v611, %v614
    %s616 = sld [smem:[#allocation2 + $0x34]]
    %v617 = vstv %s616
    %v618 = vmul.f32 %v604, %v617
    %v619 = vadd.f32 %v615, %v618
    %s620 = sld [smem:[#allocation2 + $0x35]]
    %v621 = vstv %s620
    %v622 = vmul.f32 %v606, %v621
    %v623 = vadd.f32 %v619, %v622
    %s624 = sld [smem:[#allocation2 + $0x36]]
    %v625 = vstv %s624
    %v626 = vmul.f32 %v608, %v625
    %v627 = vadd.f32 %v623, %v626
    %s628 = sld [smem:[#allocation2 + $0x37]]
    %v629 = vstv %s628
    %v630 = vmul.f32 %v600, %v629
    %s631 = sld [smem:[#allocation2 + $0x38]]
    %v632 = vstv %s631
    %v633 = vmul.f32 %v602, %v632
    %v634 = vadd.f32 %v630, %v633
    %s635 = sld [smem:[#allocation2 + $0x39]]
    %v636 = vstv %s635
    %v637 = vmul.f32 %v604, %v636
    %v638 = vadd.f32 %v634, %v637
    %s639 = sld [smem:[#allocation2 + $0x3a]]
    %v640 = vstv %s639
    %v641 = vmul.f32 %v606, %v640
    %v642 = vadd.f32 %v638, %v641
    %s643 = sld [smem:[#allocation2 + $0x3b]]
    %v644 = vstv %s643
    %v645 = vmul.f32 %v608, %v644
    %v646 = vadd.f32 %v642, %v645
    %v647 = vmul.f32 %v627, %v610
    %v648 = vmul.f32 %v646, %v629
    %v649 = vadd.f32 %v647, %v648
    %s650 = sld [smem:[#allocation6 + $0x19]]
    %v651 = vstv %s650
    %v652 = vadd.f32 %v649, %v651
    %v653 = vmax.f32 %v652, 0.0
    %s654 = scalar_lea.vmem [#allocation9], 25
    %655 = vst [vmem:[%s654] sm:$0x1] %v653
    %s656 = sld [smem:[#allocation2 + $0x33]]
    %v657 = vstv %s656
    %v658 = vmul.f32 %v627, %v657
    %s659 = sld [smem:[#allocation2 + $0x38]]
    %v660 = vstv %s659
    %v661 = vmul.f32 %v646, %v660
    %v662 = vadd.f32 %v658, %v661
    %s663 = sld [smem:[#allocation6 + $0x1a]]
    %v664 = vstv %s663
    %v665 = vadd.f32 %v662, %v664
    %v666 = vmax.f32 %v665, 0.0
    %s667 = scalar_lea.vmem [#allocation9], 26
    %668 = vst [vmem:[%s667] sm:$0x1] %v666
    %s669 = sld [smem:[#allocation2 + $0x34]]
    %v670 = vstv %s669
    %v671 = vmul.f32 %v627, %v670
    %s672 = sld [smem:[#allocation2 + $0x39]]
    %v673 = vstv %s672
    %v674 = vmul.f32 %v646, %v673
    %v675 = vadd.f32 %v671, %v674
    %s676 = sld [smem:[#allocation6 + $0x1b]]
    %v677 = vstv %s676
    %v678 = vadd.f32 %v675, %v677
    %v679 = vmax.f32 %v678, 0.0
    %s680 = scalar_lea.vmem [#allocation9], 27
    %681 = vst [vmem:[%s680] sm:$0x1] %v679
    %s682 = sld [smem:[#allocation2 + $0x35]]
    %v683 = vstv %s682
    %v684 = vmul.f32 %v627, %v683
    %s685 = sld [smem:[#allocation2 + $0x3a]]
    %v686 = vstv %s685
    %v687 = vmul.f32 %v646, %v686
    %v688 = vadd.f32 %v684, %v687
    %s689 = sld [smem:[#allocation6 + $0x1c]]
    %v690 = vstv %s689
    %v691 = vadd.f32 %v688, %v690
    %v692 = vmax.f32 %v691, 0.0
    %s693 = scalar_lea.vmem [#allocation9], 28
    %694 = vst [vmem:[%s693] sm:$0x1] %v692
    %s695 = sld [smem:[#allocation2 + $0x36]]
    %v696 = vstv %s695
    %v697 = vmul.f32 %v627, %v696
    %s698 = sld [smem:[#allocation2 + $0x3b]]
    %v699 = vstv %s698
    %v700 = vmul.f32 %v646, %v699
    %v701 = vadd.f32 %v697, %v700
    %s702 = sld [smem:[#allocation6 + $0x1d]]
    %v703 = vstv %s702
    %v704 = vadd.f32 %v701, %v703
    %v705 = vmax.f32 %v704, 0.0
    %s706 = scalar_lea.vmem [#allocation9], 29
    %707 = vst [vmem:[%s706] sm:$0x1] %v705
    %s708 = scalar_lea.vmem [#allocation8], 30
    %v709 = vld [vmem:[%s708] sm:$0x1]
    %s710 = scalar_lea.vmem [#allocation8], 31
    %v711 = vld [vmem:[%s710] sm:$0x1]
    %s712 = scalar_lea.vmem [#allocation8], 32
    %v713 = vld [vmem:[%s712] sm:$0x1]
    %s714 = scalar_lea.vmem [#allocation8], 33
    %v715 = vld [vmem:[%s714] sm:$0x1]
    %s716 = scalar_lea.vmem [#allocation8], 34
    %v717 = vld [vmem:[%s716] sm:$0x1]
    %s718 = sld [smem:[#allocation2 + $0x3c]]
    %v719 = vstv %s718
    %v720 = vmul.f32 %v709, %v719
    %s721 = sld [smem:[#allocation2 + $0x3d]]
    %v722 = vstv %s721
    %v723 = vmul.f32 %v711, %v722
    %v724 = vadd.f32 %v720, %v723
    %s725 = sld [smem:[#allocation2 + $0x3e]]
    %v726 = vstv %s725
    %v727 = vmul.f32 %v713, %v726
    %v728 = vadd.f32 %v724, %v727
    %s729 = sld [smem:[#allocation2 + $0x3f]]
    %v730 = vstv %s729
    %v731 = vmul.f32 %v715, %v730
    %v732 = vadd.f32 %v728, %v731
    %s733 = sld [smem:[#allocation2 + $0x40]]
    %v734 = vstv %s733
    %v735 = vmul.f32 %v717, %v734
    %v736 = vadd.f32 %v732, %v735
    %s737 = sld [smem:[#allocation2 + $0x41]]
    %v738 = vstv %s737
    %v739 = vmul.f32 %v709, %v738
    %s740 = sld [smem:[#allocation2 + $0x42]]
    %v741 = vstv %s740
    %v742 = vmul.f32 %v711, %v741
    %v743 = vadd.f32 %v739, %v742
    %s744 = sld [smem:[#allocation2 + $0x43]]
    %v745 = vstv %s744
    %v746 = vmul.f32 %v713, %v745
    %v747 = vadd.f32 %v743, %v746
    %s748 = sld [smem:[#allocation2 + $0x44]]
    %v749 = vstv %s748
    %v750 = vmul.f32 %v715, %v749
    %v751 = vadd.f32 %v747, %v750
    %s752 = sld [smem:[#allocation2 + $0x45]]
    %v753 = vstv %s752
    %v754 = vmul.f32 %v717, %v753
    %v755 = vadd.f32 %v751, %v754
    %v756 = vmul.f32 %v736, %v719
    %v757 = vmul.f32 %v755, %v738
    %v758 = vadd.f32 %v756, %v757
    %s759 = sld [smem:[#allocation6 + $0x1e]]
    %v760 = vstv %s759
    %v761 = vadd.f32 %v758, %v760
    %v762 = vmax.f32 %v761, 0.0
    %s763 = scalar_lea.vmem [#allocation9], 30
    %764 = vst [vmem:[%s763] sm:$0x1] %v762
    %s765 = sld [smem:[#allocation2 + $0x3d]]
    %v766 = vstv %s765
    %v767 = vmul.f32 %v736, %v766
    %s768 = sld [smem:[#allocation2 + $0x42]]
    %v769 = vstv %s768
    %v770 = vmul.f32 %v755, %v769
    %v771 = vadd.f32 %v767, %v770
    %s772 = sld [smem:[#allocation6 + $0x1f]]
    %v773 = vstv %s772
    %v774 = vadd.f32 %v771, %v773
    %v775 = vmax.f32 %v774, 0.0
    %s776 = scalar_lea.vmem [#allocation9], 31
    %777 = vst [vmem:[%s776] sm:$0x1] %v775
    %s778 = sld [smem:[#allocation2 + $0x3e]]
    %v779 = vstv %s778
    %v780 = vmul.f32 %v736, %v779
    %s781 = sld [smem:[#allocation2 + $0x43]]
    %v782 = vstv %s781
    %v783 = vmul.f32 %v755, %v782
    %v784 = vadd.f32 %v780, %v783
    %s785 = sld [smem:[#allocation6 + $0x20]]
    %v786 = vstv %s785
    %v787 = vadd.f32 %v784, %v786
    %v788 = vmax.f32 %v787, 0.0
    %s789 = scalar_lea.vmem [#allocation9], 32
    %790 = vst [vmem:[%s789] sm:$0x1] %v788
    %s791 = sld [smem:[#allocation2 + $0x3f]]
    %v792 = vstv %s791
    %v793 = vmul.f32 %v736, %v792
    %s794 = sld [smem:[#allocation2 + $0x44]]
    %v795 = vstv %s794
    %v796 = vmul.f32 %v755, %v795
    %v797 = vadd.f32 %v793, %v796
    %s798 = sld [smem:[#allocation6 + $0x21]]
    %v799 = vstv %s798
    %v800 = vadd.f32 %v797, %v799
    %v801 = vmax.f32 %v800, 0.0
    %s802 = scalar_lea.vmem [#allocation9], 33
    %803 = vst [vmem:[%s802] sm:$0x1] %v801
    %s804 = sld [smem:[#allocation2 + $0x40]]
    %v805 = vstv %s804
    %v806 = vmul.f32 %v736, %v805
    %s807 = sld [smem:[#allocation2 + $0x45]]
    %v808 = vstv %s807
    %v809 = vmul.f32 %v755, %v808
    %v810 = vadd.f32 %v806, %v809
    %s811 = sld [smem:[#allocation6 + $0x22]]
    %v812 = vstv %s811
    %v813 = vadd.f32 %v810, %v812
    %v814 = vmax.f32 %v813, 0.0
    %s815 = scalar_lea.vmem [#allocation9], 34
    %816 = vst [vmem:[%s815] sm:$0x1] %v814
    %s817 = scalar_lea.vmem [#allocation8], 35
    %v818 = vld [vmem:[%s817] sm:$0x1]
    %s819 = scalar_lea.vmem [#allocation8], 36
    %v820 = vld [vmem:[%s819] sm:$0x1]
    %s821 = scalar_lea.vmem [#allocation8], 37
    %v822 = vld [vmem:[%s821] sm:$0x1]
    %s823 = scalar_lea.vmem [#allocation8], 38
    %v824 = vld [vmem:[%s823] sm:$0x1]
    %s825 = scalar_lea.vmem [#allocation8], 39
    %v826 = vld [vmem:[%s825] sm:$0x1]
    %s827 = sld [smem:[#allocation2 + $0x46]]
    %v828 = vstv %s827
    %v829 = vmul.f32 %v818, %v828
    %s830 = sld [smem:[#allocation2 + $0x47]]
    %v831 = vstv %s830
    %v832 = vmul.f32 %v820, %v831
    %v833 = vadd.f32 %v829, %v832
    %s834 = sld [smem:[#allocation2 + $0x48]]
    %v835 = vstv %s834
    %v836 = vmul.f32 %v822, %v835
    %v837 = vadd.f32 %v833, %v836
    %s838 = sld [smem:[#allocation2 + $0x49]]
    %v839 = vstv %s838
    %v840 = vmul.f32 %v824, %v839
    %v841 = vadd.f32 %v837, %v840
    %s842 = sld [smem:[#allocation2 + $0x4a]]
    %v843 = vstv %s842
    %v844 = vmul.f32 %v826, %v843
    %v845 = vadd.f32 %v841, %v844
    %s846 = sld [smem:[#allocation2 + $0x4b]]
    %v847 = vstv %s846
    %v848 = vmul.f32 %v818, %v847
    %s849 = sld [smem:[#allocation2 + $0x4c]]
    %v850 = vstv %s849
    %v851 = vmul.f32 %v820, %v850
    %v852 = vadd.f32 %v848, %v851
    %s853 = sld [smem:[#allocation2 + $0x4d]]
    %v854 = vstv %s853
    %v855 = vmul.f32 %v822, %v854
    %v856 = vadd.f32 %v852, %v855
    %s857 = sld [smem:[#allocation2 + $0x4e]]
    %v858 = vstv %s857
    %v859 = vmul.f32 %v824, %v858
    %v860 = vadd.f32 %v856, %v859
    %s861 = sld [smem:[#allocation2 + $0x4f]]
    %v862 = vstv %s861
    %v863 = vmul.f32 %v826, %v862
    %v864 = vadd.f32 %v860, %v863
    %v865 = vmul.f32 %v845, %v828
    %v866 = vmul.f32 %v864, %v847
    %v867 = vadd.f32 %v865, %v866
    %s868 = sld [smem:[#allocation6 + $0x23]]
    %v869 = vstv %s868
    %v870 = vadd.f32 %v867, %v869
    %v871 = vmax.f32 %v870, 0.0
    %s872 = scalar_lea.vmem [#allocation9], 35
    %873 = vst [vmem:[%s872] sm:$0x1] %v871
    %s874 = sld [smem:[#allocation2 + $0x47]]
    %v875 = vstv %s874
    %v876 = vmul.f32 %v845, %v875
    %s877 = sld [smem:[#allocation2 + $0x4c]]
    %v878 = vstv %s877
    %v879 = vmul.f32 %v864, %v878
    %v880 = vadd.f32 %v876, %v879
    %s881 = sld [smem:[#allocation6 + $0x24]]
    %v882 = vstv %s881
    %v883 = vadd.f32 %v880, %v882
    %v884 = vmax.f32 %v883, 0.0
    %s885 = scalar_lea.vmem [#allocation9], 36
    %886 = vst [vmem:[%s885] sm:$0x1] %v884
    %s887 = sld [smem:[#allocation2 + $0x48]]
    %v888 = vstv %s887
    %v889 = vmul.f32 %v845, %v888
    %s890 = sld [smem:[#allocation2 + $0x4d]]
    %v891 = vstv %s890
    %v892 = vmul.f32 %v864, %v891
    %v893 = vadd.f32 %v889, %v892
    %s894 = sld [smem:[#allocation6 + $0x25]]
    %v895 = vstv %s894
    %v896 = vadd.f32 %v893, %v895
    %v897 = vmax.f32 %v896, 0.0
    %s898 = scalar_lea.vmem [#allocation9], 37
    %899 = vst [vmem:[%s898] sm:$0x1] %v897
    %s900 = sld [smem:[#allocation2 + $0x49]]
    %v901 = vstv %s900
    %v902 = vmul.f32 %v845, %v901
    %s903 = sld [smem:[#allocation2 + $0x4e]]
    %v904 = vstv %s903
    %v905 = vmul.f32 %v864, %v904
    %v906 = vadd.f32 %v902, %v905
    %s907 = sld [smem:[#allocation6 + $0x26]]
    %v908 = vstv %s907
    %v909 = vadd.f32 %v906, %v908
    %v910 = vmax.f32 %v909, 0.0
    %s911 = scalar_lea.vmem [#allocation9], 38
    %912 = vst [vmem:[%s911] sm:$0x1] %v910
    %s913 = sld [smem:[#allocation2 + $0x4a]]
    %v914 = vstv %s913
    %v915 = vmul.f32 %v845, %v914
    %s916 = sld [smem:[#allocation2 + $0x4f]]
    %v917 = vstv %s916
    %v918 = vmul.f32 %v864, %v917
    %v919 = vadd.f32 %v915, %v918
    %s920 = sld [smem:[#allocation6 + $0x27]]
    %v921 = vstv %s920
    %v922 = vadd.f32 %v919, %v921
    %v923 = vmax.f32 %v922, 0.0
    %s924 = scalar_lea.vmem [#allocation9], 39
    %925 = vst [vmem:[%s924] sm:$0x1] %v923
    // Predicated region
    $region26: #{tpu_custom_call.1} parent=1 // pred_check
      _
    $region27: #{tpu_custom_call.1} parent=1 // pred_check_branch
      %927 = sbr.rel (0) target = $region29
    $region28: #{tpu_custom_call.1} parent=1 // pred_region
      %929 = vsyncadd [#allocation4], 0
      %s930 = sshll.u32 [#allocation9], 4
      %s931 = int_to_ptr.vmem [resolvable:$true] %s930
      %s932 = sshll.u32 %s3, 4
      %s933 = int_to_ptr.hbm [resolvable:$true] %s932
      %938 = dma.vmem_to_hbm [thread:$0]  %s931, 640, %s933, [#allocation4], 16, 16, 1
    $region29: #{tpu_custom_call.1} parent=1 // pred_fallthru
      _
    // Predicated region
    $region30: #{tpu_custom_call.1} parent=1 // pred_check
      _
    $region31: #{tpu_custom_call.1} parent=1 // pred_check_branch
      %940 = sbr.rel (0) target = $region33
    $region32: #{tpu_custom_call.1} parent=1 // pred_region
      %942 = dma.done [#allocation4], 640
    $region33: #{tpu_custom_call.1} parent=1 // pred_fallthru
      _
    %943 = vsyncpa [#allocation3], 1
    %944 = vsyncpa [#allocation4], 1
    %945 = vsyncpa [#allocation5], 1
    %946 = vsyncpa [#allocation7], 1

</llo_original>
